<compile_context>
chip_gen: v6e
topology: v6e:2x2x1
jax: 0.10.0
libtpu: 0.0.40
codegen_flags: <defaults>
</compile_context>

<pallas_src>
import jax
import jax.numpy as jnp
from jax import lax
from jax.experimental import pallas as pl
from jax.experimental.pallas import tpu as pltpu

EPSILON = 1e-3


# --------------------------------------------------------------------------
# Kernel 1 (runs once per gammap, inside the cached precompute):
#   H = X^T X + eps*I + vec_R @ inv(R_cap) @ vec_R^T + (1/gammap) vec_Q vec_Q^T
# All operands arrive pre-transposed / pre-scaled so every contraction is the
# MXU-natural (last dim of LHS) x (first dim of RHS) form.
# --------------------------------------------------------------------------
def _h_kernel(XT_ref, X_ref, vecR_ref, invRcap_ref, vecRT_ref,
              vecQg_ref, vecQT_ref, H_ref):
    s = H_ref.shape[0]
    xtx = jnp.dot(XT_ref[...], X_ref[...],
                  preferred_element_type=jnp.float32)            # X^T @ X
    tmp = jnp.dot(vecR_ref[...], invRcap_ref[...],
                  preferred_element_type=jnp.float32)            # vecR @ Rcap^-1
    t_r = jnp.dot(tmp, vecRT_ref[...],
                  preferred_element_type=jnp.float32)            # ... @ vecR^T
    t_q = jnp.dot(vecQg_ref[...], vecQT_ref[...],
                  preferred_element_type=jnp.float32)            # (vecQ/g) @ vecQ^T
    rows = lax.broadcasted_iota(jnp.int32, (s, s), 0)
    cols = lax.broadcasted_iota(jnp.int32, (s, s), 1)
    eps_eye = jnp.where(rows == cols, jnp.float32(EPSILON), jnp.float32(0.0))
    H_ref[...] = xtx + eps_eye + t_r + t_q


# --------------------------------------------------------------------------
# Kernel 2 (per timestep): sequential epsilon recursion (strictly lower-
# triangular D11, ReLU activation), then
#   xi_ = ([xi|w] @ [F^T;B2^T] + eps @ B1^T) @ E^{-T}
#   u   =  [xi|w] @ [C2^T;D22^T] + eps @ D21^T
# eps is carried in vector registers; the L-step loop is fully unrolled.
# --------------------------------------------------------------------------
def _ren_fwd_kernel(xiw_ref, Wv_ref, D11T_ref, invlam_ref,
                    Wexi_ref, B1T_ref, EinvT_ref, Wu_ref, D21T_ref,
                    u_ref, xi_out_ref):
    f32 = jnp.float32
    L = invlam_ref.shape[1]

    xiw = xiw_ref[...]                                           # (1, n_xi+n)
    # eps-independent part of every v_i at once: xi @ C1^T + w @ D12^T
    a = jnp.dot(xiw, Wv_ref[...], preferred_element_type=f32)    # (1, L)
    inv_lam = invlam_ref[...]                                    # (1, L)
    D11T = D11T_ref[...]                                         # (L, L)
    lane = lax.broadcasted_iota(jnp.int32, (1, L), 1)

    # step 0: no D11 term (matches the reference)
    eps = jnp.where(lane == 0, jnp.maximum(a * inv_lam, 0.0), jnp.float32(0.0))
    # steps 1..L-1, fully unrolled; eps stays in vregs the whole time.
    # D11 is strictly lower triangular, so v[i] computed from the current eps
    # (entries > i still zero) is exactly the reference v_i.
    for i in range(1, L):
        v = a + jnp.dot(eps, D11T, preferred_element_type=f32)   # (1, L)
        eps = jnp.where(lane == i, jnp.maximum(v * inv_lam, 0.0), eps)

    exi = (jnp.dot(xiw, Wexi_ref[...], preferred_element_type=f32)
           + jnp.dot(eps, B1T_ref[...], preferred_element_type=f32))
    xi_out_ref[...] = jnp.dot(exi, EinvT_ref[...], preferred_element_type=f32)
    u_ref[...] = (jnp.dot(xiw, Wu_ref[...], preferred_element_type=f32)
                  + jnp.dot(eps, D21T_ref[...], preferred_element_type=f32))


class RENRGPallas:
    """JAX / Pallas port of the PyTorch RENRG module."""

    def __init__(self, n, m, n_xi, l, key):
        self.n, self.m, self.n_xi, self.l = n, m, n_xi, l
        self.epsilon = EPSILON
        ks = jax.random.split(key, 12)
        std = 1.0
        s = 2 * n_xi + l
        self.X = jax.random.normal(ks[0], (s, s), jnp.float32) * std
        self.Y = jax.random.normal(ks[1], (n_xi, n_xi), jnp.float32) * std
        self.B2 = jax.random.normal(ks[2], (n_xi, n), jnp.float32) * std
        self.C2 = jax.random.normal(ks[3], (m, n_xi), jnp.float32) * std
        self.D21 = jax.random.normal(ks[4], (m, l), jnp.float32) * std
        if m >= n:
            self.Z3 = jax.random.normal(ks[5], (m - n, n), jnp.float32) * std
            self.X3 = jax.random.normal(ks[6], (n, n), jnp.float32) * std
            self.Y3 = jax.random.normal(ks[7], (n, n), jnp.float32) * std
        else:
            self.Z3 = jax.random.normal(ks[5], (n - m, m), jnp.float32) * std
            self.X3 = jax.random.normal(ks[6], (m, m), jnp.float32) * std
            self.Y3 = jax.random.normal(ks[7], (m, m), jnp.float32) * std
        self.D12 = jax.random.normal(ks[8], (l, n), jnp.float32) * std
        # biases exist in the PyTorch module but are unused in its forward()
        self.bxi = jax.random.normal(ks[9], (n_xi,), jnp.float32)
        self.bv = jax.random.normal(ks[10], (l,), jnp.float32)
        self.bu = jax.random.normal(ks[11], (m,), jnp.float32)

        self._precompute_jit = jax.jit(self._precompute)
        self._step_jit = jax.jit(self._step)
        self._cache = {}   # gammap (Python float) -> precomputed weight pytree

    # ---------------- gammap-only work: run once per gammap, then cached ----
    def _precompute(self, gammap):
        n, m, n_xi, l = self.n, self.m, self.n_xi, self.l
        dim = min(n, m)
        f32 = jnp.float32
        gammap = jnp.asarray(gammap, f32)

        # D22 via the gamma parameterization (Cayley-style transform)
        I_dim = jnp.eye(dim, dtype=f32)
        M = (self.X3.T @ self.X3 + self.Y3 - self.Y3.T
             + self.Z3.T @ self.Z3 + self.epsilon * I_dim)
        # TODO(synk): matrix inversion has no Pallas primitive; jnp.linalg.inv in glue.
        inv_IM = jnp.linalg.inv(I_dim + M)
        if m >= n:
            N = jnp.vstack([(I_dim - M) @ inv_IM, -2.0 * self.Z3 @ inv_IM])
        else:
            N = jnp.hstack([inv_IM @ (I_dim - M), -2.0 * inv_IM @ self.Z3.T])
        D22 = gammap * N                                              # (m, n)

        inv_g = 1.0 / gammap
        q_scale = -inv_g                                              # Q = q_scale * I_m
        R_cap = gammap * jnp.eye(n, dtype=f32) - inv_g * (D22.T @ D22)
        C2_cap = (D22.T * q_scale) @ self.C2                          # (n, n_xi)
        D21_cap = (D22.T * q_scale) @ self.D21 - self.D12.T           # (n, l)
        vec_R = jnp.concatenate([C2_cap.T, D21_cap.T, self.B2], axis=0)     # (s, n)
        vec_Q = jnp.concatenate([self.C2.T, self.D21.T,
                                 jnp.zeros((n_xi, m), f32)], axis=0)        # (s, m)
        # TODO(synk): matrix inversion has no Pallas primitive; jnp.linalg.inv in glue.
        inv_Rcap = jnp.linalg.inv(R_cap)

        # Pallas kernel 1: build H (no scalar operand; 1/gammap folded into vec_Q)
        s = 2 * n_xi + l
        vmem = pl.BlockSpec(memory_space=pltpu.MemorySpace.VMEM)
        H = pl.pallas_call(
            _h_kernel,
            out_shape=jax.ShapeDtypeStruct((s, s), f32),
            in_specs=[vmem] * 7,
            out_specs=vmem,
        )(self.X.T, self.X, vec_R, inv_Rcap, vec_R.T, inv_g * vec_Q, vec_Q.T)

        # Split H into blocks and derive the implicit-REN matrices (glue)
        H11 = H[:n_xi, :n_xi]
        H21 = H[n_xi:n_xi + l, :n_xi]
        H22 = H[n_xi:n_xi + l, n_xi:n_xi + l]
        H31 = H[n_xi + l:, :n_xi]
        H32 = H[n_xi + l:, n_xi:n_xi + l]
        H33 = H[n_xi + l:, n_xi + l:]
        F_mat = H31
        B1 = H32
        E = 0.5 * (H11 + H33 + self.Y - self.Y.T)
        Lambda = jnp.diag(H22)
        D11 = -jnp.tril(H22, k=-1)
        C1 = -H21
        # TODO(synk): matrix inversion has no Pallas primitive; jnp.linalg.inv in glue.
        Einv = jnp.linalg.inv(E)

        # Pre-stacked / pre-transposed weights for the per-timestep kernel.
        return {
            "Wv":     jnp.concatenate([C1.T, self.D12.T], axis=0),    # (n_xi+n, l)
            "D11T":   D11.T,                                          # (l, l)
            "invlam": (1.0 / Lambda).reshape(1, l),                   # (1, l)
            "Wexi":   jnp.concatenate([F_mat.T, self.B2.T], axis=0),  # (n_xi+n, n_xi)
            "B1T":    B1.T,                                           # (l, n_xi)
            "EinvT":  Einv.T,                                         # (n_xi, n_xi)
            "Wu":     jnp.concatenate([self.C2.T, D22.T], axis=0),    # (n_xi+n, m)
            "D21T":   self.D21.T,                                     # (l, m)
        }

    # ---------------- per-timestep hot path ---------------------------------
    def _step(self, pre, w, xi):
        f32 = jnp.float32
        n, m, n_xi = self.n, self.m, self.n_xi
        xiw = jnp.concatenate([jnp.asarray(xi, f32).reshape(1, n_xi),
                               jnp.asarray(w, f32).reshape(1, n)], axis=1)
        vmem = pl.BlockSpec(memory_space=pltpu.MemorySpace.VMEM)
        u_row, xi_row = pl.pallas_call(
            _ren_fwd_kernel,
            out_shape=(jax.ShapeDtypeStruct((1, m), f32),
                       jax.ShapeDtypeStruct((1, n_xi), f32)),
            in_specs=[vmem] * 9,
            out_specs=(vmem, vmem),
        )(xiw, pre["Wv"], pre["D11T"], pre["invlam"],
          pre["Wexi"], pre["B1T"], pre["EinvT"], pre["Wu"], pre["D21T"])
        return u_row.reshape(m), xi_row.reshape(n_xi)

    def forward(self, t, w, xi, gammap):
        # NOTE: for a T-step rollout one would additionally run the dynamics
        # kernel over grid=(T,) in a single pallas_call (weights VMEM-resident,
        # xi carried in scratch); kept single-step here to match the module API.
        key = float(gammap)
        if key not in self._cache:
            self._cache[key] = self._precompute_jit(jnp.asarray(gammap, jnp.float32))
        pre = self._cache[key]
        return self._step_jit(pre, w, xi)


if __name__ == "__main__":
    # small shapes consistent with the module: n=4 inputs, m=6 outputs,
    # n_xi=8 states, l=8 nonlinear layer width  =>  H is (24, 24)
    n, m, n_xi, l = 4, 6, 8, 8
    key = jax.random.PRNGKey(0)
    k_params, k_w, k_xi = jax.random.split(key, 3)

    model = RENRGPallas(n, m, n_xi, l, k_params)
    w = jax.random.normal(k_w, (n,), jnp.float32)
    xi = jax.random.normal(k_xi, (n_xi,), jnp.float32)
    gammap = 2.0

    u, xi_next = model.forward(0, w, xi, gammap)
    jax.block_until_ready((u, xi_next))
    # second step hits the cached gammap precompute (hot per-step path only)
    u2, xi_next2 = model.forward(1, w, xi_next, gammap)
    jax.block_until_ready((u2, xi_next2))

    assert u.shape == (m,) and xi_next.shape == (n_xi,)
    assert u2.shape == (m,) and xi_next2.shape == (n_xi,)
    print("KERNEL_OK")
</pallas_src>

<mosaic_0001>
module attributes {stable_mosaic.version = 11 : i64} {
  func.func @_h_kernel(%arg0: memref<24x24xf32, #tpu.memory_space<vmem>>, %arg1: memref<24x24xf32, #tpu.memory_space<vmem>>, %arg2: memref<24x4xf32, #tpu.memory_space<vmem>>, %arg3: memref<4x4xf32, #tpu.memory_space<vmem>>, %arg4: memref<4x24xf32, #tpu.memory_space<vmem>>, %arg5: memref<24x6xf32, #tpu.memory_space<vmem>>, %arg6: memref<6x24xf32, #tpu.memory_space<vmem>>, %arg7: memref<24x24xf32, #tpu.memory_space<vmem>>) attributes {dimension_semantics = [], scalar_prefetch = 0 : i64, scratch_operands = 0 : i64, tpu.core_type = #tpu.core_type<tc>} {
    %c0 = arith.constant 0 : index
    %c0_0 = arith.constant 0 : index
    %0 = vector.load %arg0[%c0, %c0_0] : memref<24x24xf32, #tpu.memory_space<vmem>>, vector<24x24xf32>
    %c0_1 = arith.constant 0 : index
    %c0_2 = arith.constant 0 : index
    %1 = vector.load %arg1[%c0_1, %c0_2] : memref<24x24xf32, #tpu.memory_space<vmem>>, vector<24x24xf32>
    %cst = arith.constant dense<0.000000e+00> : vector<24x24xf32>
    %2 = tpu.matmul %0, %1, %cst {dimension_numbers = #tpu.dot_dimension_numbers<[1], [0], [0], [1], [0, 0, 1, 1], [], []>} : vector<24x24xf32>, vector<24x24xf32>, vector<24x24xf32> -> vector<24x24xf32>
    %c0_3 = arith.constant 0 : index
    %c0_4 = arith.constant 0 : index
    %3 = vector.load %arg2[%c0_3, %c0_4] : memref<24x4xf32, #tpu.memory_space<vmem>>, vector<24x4xf32>
    %c0_5 = arith.constant 0 : index
    %c0_6 = arith.constant 0 : index
    %4 = vector.load %arg3[%c0_5, %c0_6] : memref<4x4xf32, #tpu.memory_space<vmem>>, vector<4x4xf32>
    %cst_7 = arith.constant dense<0.000000e+00> : vector<24x4xf32>
    %5 = tpu.matmul %3, %4, %cst_7 {dimension_numbers = #tpu.dot_dimension_numbers<[1], [0], [0], [1], [0, 0, 1, 1], [], []>} : vector<24x4xf32>, vector<4x4xf32>, vector<24x4xf32> -> vector<24x4xf32>
    %c0_8 = arith.constant 0 : index
    %c0_9 = arith.constant 0 : index
    %6 = vector.load %arg4[%c0_8, %c0_9] : memref<4x24xf32, #tpu.memory_space<vmem>>, vector<4x24xf32>
    %cst_10 = arith.constant dense<0.000000e+00> : vector<24x24xf32>
    %7 = tpu.matmul %5, %6, %cst_10 {dimension_numbers = #tpu.dot_dimension_numbers<[1], [0], [0], [1], [0, 0, 1, 1], [], []>} : vector<24x4xf32>, vector<4x24xf32>, vector<24x24xf32> -> vector<24x24xf32>
    %c0_11 = arith.constant 0 : index
    %c0_12 = arith.constant 0 : index
    %8 = vector.load %arg5[%c0_11, %c0_12] : memref<24x6xf32, #tpu.memory_space<vmem>>, vector<24x6xf32>
    %c0_13 = arith.constant 0 : index
    %c0_14 = arith.constant 0 : index
    %9 = vector.load %arg6[%c0_13, %c0_14] : memref<6x24xf32, #tpu.memory_space<vmem>>, vector<6x24xf32>
    %cst_15 = arith.constant dense<0.000000e+00> : vector<24x24xf32>
    %10 = tpu.matmul %8, %9, %cst_15 {dimension_numbers = #tpu.dot_dimension_numbers<[1], [0], [0], [1], [0, 0, 1, 1], [], []>} : vector<24x6xf32>, vector<6x24xf32>, vector<24x24xf32> -> vector<24x24xf32>
    %11 = tpu.iota {dimensions = array<i32: 0>} : vector<24x24xi32>
    %12 = tpu.iota {dimensions = array<i32: 1>} : vector<24x24xi32>
    %13 = arith.cmpi eq, %11, %12 : vector<24x24xi32>
    %cst_16 = arith.constant 1.000000e-03 : f32
    %cst_17 = arith.constant 0.000000e+00 : f32
    %14 = vector.broadcast %cst_16 : f32 to vector<24x24xf32>
    %15 = vector.broadcast %cst_17 : f32 to vector<24x24xf32>
    %16 = arith.select %13, %14, %15 : vector<24x24xi1>, vector<24x24xf32>
    %17 = arith.addf %2, %16 : vector<24x24xf32>
    %18 = arith.addf %17, %7 : vector<24x24xf32>
    %19 = arith.addf %18, %10 : vector<24x24xf32>
    %c0_18 = arith.constant 0 : index
    %c0_19 = arith.constant 0 : index
    %20 = vector.load %arg7[%c0_18, %c0_19] : memref<24x24xf32, #tpu.memory_space<vmem>>, vector<24x24xf32>
    tpu.vector_store %arg7[%c0_18, %c0_19], %19 {strides = array<i32>} : memref<24x24xf32, #tpu.memory_space<vmem>>, vector<24x24xf32>,
    return
  }
}

</mosaic_0001>

<llo_original>
// kernel: custom-call.30
$region0: #{custom-call.30}
  %s0 = inlined_call_operand.vmem [shape: f32[4,4], index: 0, kind: input, shape index: {}]
  %s1 = inlined_call_operand.vmem [shape: f32[4,4], index: 1, kind: output, shape index: {0}]
  %s2 = inlined_call_operand.hbm [shape: s32[4], index: 2, kind: output, shape index: {1}]
  %s3 = inlined_call_operand.vmem [shape: s32[4], index: 3, kind: output, shape index: {2}]
  %4 = xla_tuple %s1, %s2, %s3
  $region1: #{custom-call.30} parent=0
    #allocation0 [shape = 'u8[4096]{0}', space=vmem, size = 0x1000, scoped, tag = 'operand span for operand 0']
    #allocation1 [shape = 'u8[2048]{0}', space=vmem, size = 0x800, scoped, tag = 'packed  for operand 0']
    #allocation2 [shape = 'u8[4096]{0}', space=vmem, size = 0x1000, scoped, tag = 'operand span for operand 1']
    #allocation3 [shape = 'u8[2048]{0}', space=vmem, size = 0x800, scoped, tag = 'packed  for operand 1']
    #allocation4 [shape = 'u8[4096]{0}', space=vmem, size = 0x1000, scoped, tag = 'operand span for operand 2']
    #allocation5 [shape = 'u8[512]{0}', space=vmem, size = 0x400, scoped, tag = 'packed  for operand 2']
    #allocation6 [shape = 's32[1]{0}', space=sflag, size = 0x4, scoped, tag = 'scoped memory for custom-call.30']
    #allocation7 [shape = 'u8[4096]{0}', space=vmem, size = 0x1000, scoped, tag = 'operand span for operand 3']
    #allocation8 [shape = 'u8[512]{0}', space=vmem, size = 0x400, scoped, tag = 'packed  for operand 3']
    #allocation9 [shape = 's32[4,128]{1,0}', space=vmem, size = 0x1000, scoped, tag = 'scratch for permutations']
    %5 = vsyncpa [#allocation6], 0
    %p7 = scmp.gt.s32.totalorder 4, 0
    // Predicated region
    $region2: #{custom-call.30} parent=1 // pred_check
      %p8 = pneg %p7
    $region3: #{custom-call.30} parent=1 // pred_check_branch
      %10 = sbr.rel (%p8) target = $region5
    $region4: #{custom-call.30} parent=1 // pred_region
      %s11 = sshra.s32 4, 3
      %p12 = scmp.gt.s32.totalorder %s11, 0
      // Predicated region
      $region6: #{custom-call.30} parent=4 // pred_check
        %p13 = pneg %p12
      $region7: #{custom-call.30} parent=4 // pred_check_branch
        %15 = sbr.rel (%p13) target = $region9
      $region8: #{custom-call.30} parent=4 // pred_region
        %s16 = ssub.s32 %s11, 1
        %s17 = smul.u32 %s16, 128
        %s18 = sshra.s32 %s17, 4
        %s19 = scalar_lea.vmem %s0, %s18
        %v20 = vld [vmem:[%s0] sm:$0xff]
        // While loop
        $region10: #{custom-call.30} parent=8 // loop_pre_header
          _
        $region11: #{custom-call.30} parent=8 // loop_header
          %s21 = sphi %s0, %s43
          %s22 = sphi [#allocation1], %s44
          %v23 = vphi %v20, %v45
          %s24 = ssub.s32 %s19, 64
          %p25 = scmp.gt.s32.totalorder %s21, %s24
        $region12: #{custom-call.30} parent=8 // loop_header_branch
          %27 = sbr.rel (%p25) target = $region16
        $region13: #{custom-call.30} parent=8 // loop_body
          %28 = vst [vmem:[%s22] sm:$0xff] %v23
          %v29 = vld [vmem:[%s21 + $0x8] sm:$0xff]
          %30 = vst [vmem:[%s22 + $0x8] sm:$0xff] %v29
          %v31 = vld [vmem:[%s21 + $0x10] sm:$0xff]
          %32 = vst [vmem:[%s22 + $0x10] sm:$0xff] %v31
          %v33 = vld [vmem:[%s21 + $0x18] sm:$0xff]
          %34 = vst [vmem:[%s22 + $0x18] sm:$0xff] %v33
          %v35 = vld [vmem:[%s21 + $0x20] sm:$0xff]
          %36 = vst [vmem:[%s22 + $0x20] sm:$0xff] %v35
          %v37 = vld [vmem:[%s21 + $0x28] sm:$0xff]
          %38 = vst [vmem:[%s22 + $0x28] sm:$0xff] %v37
          %v39 = vld [vmem:[%s21 + $0x30] sm:$0xff]
          %40 = vst [vmem:[%s22 + $0x30] sm:$0xff] %v39
          %v41 = vld [vmem:[%s21 + $0x38] sm:$0xff]
          %42 = vst [vmem:[%s22 + $0x38] sm:$0xff] %v41
        $region14: #{custom-call.30} parent=8 // loop_footer
          %s43 = scalar_lea.vmem %s21, 64
          %s44 = scalar_lea.vmem %s22, 64
          %v45 = vld [vmem:[%s21 + $0x40] sm:$0xff]
        $region15: #{custom-call.30} parent=8 // loop_footer_branch
          %46 = sbr.rel target = $region11
        $region16: #{custom-call.30} parent=8 // loop_exit
          _
        // While loop
        $region17: #{custom-call.30} parent=8 // loop_pre_header
          _
        $region18: #{custom-call.30} parent=8 // loop_header
          %s47 = sphi %s21, %s55
          %s48 = sphi %s22, %s56
          %v49 = vphi %v23, %v49
          %p50 = scmp.gt.s32.totalorder %s47, %s19
        $region19: #{custom-call.30} parent=8 // loop_header_branch
          %52 = sbr.rel (%p50) target = $region23
        $region20: #{custom-call.30} parent=8 // loop_body
          %v53 = vld [vmem:[%s47] sm:$0xff]
          %54 = vst [vmem:[%s48] sm:$0xff] %v53
        $region21: #{custom-call.30} parent=8 // loop_footer
          %s55 = scalar_lea.vmem %s47, 8
          %s56 = scalar_lea.vmem %s48, 8
        $region22: #{custom-call.30} parent=8 // loop_footer_branch
          %57 = sbr.rel target = $region18
        $region23: #{custom-call.30} parent=8 // loop_exit
          _
      $region9: #{custom-call.30} parent=4 // pred_fallthru
        _
      %s58 = sand.u32 4, 7
      %s59 = sshll.u32 1, %s58
      %s60 = ssub.s32 %s59, 1
      %s61 = smul.u32 %s11, 128
      %s62 = sshra.s32 %s61, 4
      %s63 = scalar_lea.vmem [#allocation1], %s62
      %s64 = smul.u32 %s11, 128
      %s65 = sshra.s32 %s64, 4
      %s66 = scalar_lea.vmem %s0, %s65
      %v67 = vld [vmem:[%s66] sm:%s60]
      %68 = vst [vmem:[%s63] sm:%s60] %v67
    $region5: #{custom-call.30} parent=1 // pred_fallthru
      _
    %s70 = sshll.u32 1, 4
    %s71 = ssub.s32 %s70, 1
    %v72 = vld [vmem:[#allocation1] sm:%s71]
    %73 = vst [vmem:[#allocation0] sm:%s71] %v72
    %v74 = vld [vmem:[#allocation0] sm:$0xff]
    %75 = vst [vmem:[#allocation2] sm:$0xff] %v74
    %76 = vst [vmem:[#allocation4] sm:$0x1] 0
    %v77 = vlaneseq
    %v78 = vshrl.u32 %v77, 7
    %v79 = vmov %v78
    %81 = vst [vmem:[#allocation9] sm:$0xff] %v79
    loop: start=0, step=1, limit=4
    $region25: #{custom-call.30} parent=1 // loop_pre_header
      _
    $region26: #{custom-call.30} parent=1 // loop_header
      %s83 = sphi 0, %s87
      %p84 = scmp.ge.s32.totalorder %s83, 4
    $region27: #{custom-call.30} parent=1 // loop_header_branch
      %86 = sbr.rel (%p84) target = $region31
    $region28: #{custom-call.30} parent=1 // loop_body
      %v88 = vstv %s83
      %v89 = vlaneseq
      %v90 = vshrl.u32 %v89, 7
      %v91 = vmov %v90
      %v92 = vld [vmem:[#allocation2] sm:$0xff]
      %v93 = vand.u32 2147483647, %v92
      %v95 = vstv %s83
      %vm96 = vcmp.ge.s32.totalorder %v91, %v95
      %vm97 = vcmp.lt.s32.totalorder %v91, 4
      %vm98 = vmand %vm96, %vm97
      %vm99 = vcmp.lt.f32.partialorder -inf, %v93
      %vm100 = vmand %vm98, %vm99
      %v101 = vsel %vm100, %v91, %v88
      %v102 = vsel %vm100, %v93, -inf
      %v103 = vrot.slane %v102, 1
      %v104 = vrot.slane %v101, 1
      %vm105 = vcmp.ge.f32.partialorder %v103, %v102
      %v106 = vsel %vm105, %v103, %v102
      %v107 = vsel %vm105, %v104, %v101
      %v108 = vrot.slane %v103, 1
      %v109 = vrot.slane %v104, 1
      %vm110 = vcmp.ge.f32.partialorder %v108, %v106
      %v111 = vsel %vm110, %v108, %v106
      %v112 = vsel %vm110, %v109, %v107
      %v113 = vrot.slane %v108, 1
      %v114 = vrot.slane %v109, 1
      %vm115 = vcmp.ge.f32.partialorder %v113, %v111
      %v116 = vsel %vm115, %v113, %v111
      %v117 = vsel %vm115, %v114, %v112
      %v118 = vrot.slane %v113, 1
      %v119 = vrot.slane %v114, 1
      %vm120 = vcmp.ge.f32.partialorder %v118, %v116
      %v121 = vsel %vm120, %v118, %v116
      %v122 = vsel %vm120, %v119, %v117
      %v123 = vrot.slane %v118, 1
      %v124 = vrot.slane %v119, 1
      %vm125 = vcmp.ge.f32.partialorder %v123, %v121
      %v126 = vsel %vm125, %v123, %v121
      %v127 = vsel %vm125, %v124, %v122
      %v128 = vrot.slane %v123, 1
      %v129 = vrot.slane %v124, 1
      %vm130 = vcmp.ge.f32.partialorder %v128, %v126
      %v131 = vsel %vm130, %v128, %v126
      %v132 = vsel %vm130, %v129, %v127
      %v133 = vrot.slane %v128, 1
      %v134 = vrot.slane %v129, 1
      %vm135 = vcmp.ge.f32.partialorder %v133, %v131
      %v136 = vsel %vm135, %v133, %v131
      %v137 = vsel %vm135, %v134, %v132
      %s138 = ssub.s32 128, %s83
      %139 = vrot.lane.b32.xlu0 %v137, %s138
      %v140 = vpop.permute.xlu0 %139
      %s141 = vtos %v140
      %v142 = vstv %s83
      %v143 = vlaneseq
      %v144 = vand.u32 %v143, 127
      %vm145 = vcmp.eq.s32.totalorder %v144, %v142
      %v146 = vstv %s141
      %v147 = vld [vmem:[#allocation4] ss:$0 sm:$0xff]
      %v148 = vsel %vm145, %v146, %v147
      %149 = vst [vmem:[#allocation4] sm:$0x1] %v148
      %s150 = scalar_lea.vmem [#allocation2], %s83
      %s151 = scalar_lea.vmem [#allocation2], %s141
      %v152 = vld [vmem:[%s150] ss:$0 sm:$0xff]
      %v153 = vld [vmem:[%s151] ss:$0 sm:$0xff]
      %154 = vst [vmem:[%s151] sm:$0x1] %v152
      %155 = vst [vmem:[%s150] sm:$0x1] %v153
      %s156 = scalar_lea.vmem [#allocation9], %s83
      %s157 = scalar_lea.vmem [#allocation9], %s141
      %v158 = vld [vmem:[%s156] ss:$0 sm:$0xff]
      %v159 = vld [vmem:[%s157] ss:$0 sm:$0xff]
      %160 = vst [vmem:[%s157] sm:$0x1] %v158
      %161 = vst [vmem:[%s156] sm:$0x1] %v159
      %vm162 = vcmp.ne.f32.partialorder %v153, 0.0
      %vm163 = vmand %vm145, %vm162
      %v164 = vsel %vm163, %v153, 1.0
      %v165 = vlaneseq
      %v166 = vand.u32 %v165, 127
      %v167 = vstv %s83
      %vm168 = vcmp.gt.s32.totalorder %v166, %v167
      %v169 = vsel %vm168, %v153, 0.0
      %v170 = vlaneseq
      %v171 = vshrl.u32 %v170, 7
      %v172 = vmov %v171
      %v173 = vld [vmem:[#allocation2] sm:$0xff]
      %v175 = vstv %s83
      %vm176 = vcmp.gt.s32.totalorder %v172, %v175
      %v177 = vsel %vm176, %v164, 1.0
      %v178 = vrcp.pop %v177
      %v179 = vmul.f32 %v173, %v178
      %vm180 = vmand %vm176, %vm145
      %v181 = vsel %vm180, %v179, 0.0
      %182 = vadd.xlane.f32.xlu0 %v181
      %v183 = vpop.xlane.xlu0 %182
      %v184 = vmul.f32 %v183, %v169
      %v185 = vsub.f32 %v179, %v184
      %186 = vst [vmem:[#allocation2] sm:$0xff] %v185
    $region29: #{custom-call.30} parent=1 // loop_footer
      %s87 = sadd.s32 1, %s83
    $region30: #{custom-call.30} parent=1 // loop_footer_branch
      %82 = sbr.rel target = $region26
    $region31: #{custom-call.30} parent=1 // loop_exit
      _
    %v187 = vld [vmem:[#allocation9] sm:$0xff]
    %s188 = scalar_lea.vmem [#allocation9], 8
    %s189 = scalar_lea.vmem [#allocation9], 16
    %s190 = scalar_lea.vmem [#allocation9], 24
    %s191 = scalar_lea.vmem [#allocation9], 32
    %s192 = scalar_lea.vmem [#allocation9], 40
    %s193 = scalar_lea.vmem [#allocation9], 48
    %s194 = scalar_lea.vmem [#allocation9], 56
    %s195 = scalar_lea.vmem [#allocation9], 64
    %s196 = scalar_lea.vmem [#allocation9], 72
    %s197 = scalar_lea.vmem [#allocation9], 80
    %s198 = scalar_lea.vmem [#allocation9], 88
    %s199 = scalar_lea.vmem [#allocation9], 96
    %s200 = scalar_lea.vmem [#allocation9], 104
    %s201 = scalar_lea.vmem [#allocation9], 112
    %s202 = scalar_lea.vmem [#allocation9], 120
    %203 = vxpose.xlu0.b32.start [1/16] %v187, 128
    %204 = vxpose.xlu0.b32.cont [2/16] 0, 128
    %205 = vxpose.xlu0.b32.cont [3/16] 0, 128
    %206 = vxpose.xlu0.b32.cont [4/16] 0, 128
    %207 = vxpose.xlu0.b32.cont [5/16] 0, 128
    %208 = vxpose.xlu0.b32.cont [6/16] 0, 128
    %209 = vxpose.xlu0.b32.cont [7/16] 0, 128
    %210 = vxpose.xlu0.b32.cont [8/16] 0, 128
    %211 = vxpose.xlu0.b32.cont [9/16] 0, 128
    %212 = vxpose.xlu0.b32.cont [10/16] 0, 128
    %213 = vxpose.xlu0.b32.cont [11/16] 0, 128
    %214 = vxpose.xlu0.b32.cont [12/16] 0, 128
    %215 = vxpose.xlu0.b32.cont [13/16] 0, 128
    %216 = vxpose.xlu0.b32.cont [14/16] 0, 128
    %217 = vxpose.xlu0.b32.cont [15/16] 0, 128
    %218 = vxpose.xlu0.b32.end [16/16] 0, 128
    %v219 = vpop.trf.xlu0
    %v220 = vpop.trf.xlu0
    %v221 = vpop.trf.xlu0
    %v222 = vpop.trf.xlu0
    %v223 = vpop.trf.xlu0
    %v224 = vpop.trf.xlu0
    %v225 = vpop.trf.xlu0
    %v226 = vpop.trf.xlu0
    %v227 = vpop.trf.xlu0
    %v228 = vpop.trf.xlu0
    %v229 = vpop.trf.xlu0
    %v230 = vpop.trf.xlu0
    %v231 = vpop.trf.xlu0
    %v232 = vpop.trf.xlu0
    %v233 = vpop.trf.xlu0
    %v234 = vpop.trf.xlu0
    %235 = vst [vmem:[#allocation7] sm:$0x1] %v219
    %s237 = sshll.u32 1, 4
    %s238 = ssub.s32 %s237, 1
    %v240 = vld [vmem:[#allocation2] sm:%s238]
    %s241 = sshll.u32 1, 4
    %s242 = ssub.s32 %s241, 1
    %243 = vst [vmem:[#allocation3] sm:%s242] %v240
    %s245 = sshll.u32 1, 1
    %s246 = ssub.s32 %s245, 1
    %v248 = vld [vmem:[#allocation4] sm:%s246]
    %s249 = sshll.u32 1, 1
    %s250 = ssub.s32 %s249, 1
    %251 = vst [vmem:[#allocation5] sm:%s250] %v248
    %s253 = sshll.u32 1, 1
    %s254 = ssub.s32 %s253, 1
    %v256 = vld [vmem:[#allocation7] sm:%s254]
    %s257 = sshll.u32 1, 1
    %s258 = ssub.s32 %s257, 1
    %259 = vst [vmem:[#allocation8] sm:%s258] %v256
    %p261 = scmp.gt.s32.totalorder 4, 0
    // Predicated region
    $region32: #{custom-call.30} parent=1 // pred_check
      %p262 = pneg %p261
    $region33: #{custom-call.30} parent=1 // pred_check_branch
      %264 = sbr.rel (%p262) target = $region35
    $region34: #{custom-call.30} parent=1 // pred_region
      %s265 = sshra.s32 4, 3
      %p266 = scmp.gt.s32.totalorder %s265, 0
      // Predicated region
      $region36: #{custom-call.30} parent=34 // pred_check
        %p267 = pneg %p266
      $region37: #{custom-call.30} parent=34 // pred_check_branch
        %269 = sbr.rel (%p267) target = $region39
      $region38: #{custom-call.30} parent=34 // pred_region
        %s270 = ssub.s32 %s265, 1
        %s271 = smul.u32 %s270, 128
        %s272 = sshra.s32 %s271, 4
        %s273 = scalar_lea.vmem [#allocation3], %s272
        %v274 = vld [vmem:[#allocation3] sm:$0xff]
        // While loop
        $region40: #{custom-call.30} parent=38 // loop_pre_header
          _
        $region41: #{custom-call.30} parent=38 // loop_header
          %s275 = sphi [#allocation3], %s297
          %s276 = sphi %s1, %s298
          %v277 = vphi %v274, %v299
          %s278 = ssub.s32 %s273, 64
          %p279 = scmp.gt.s32.totalorder %s275, %s278
        $region42: #{custom-call.30} parent=38 // loop_header_branch
          %281 = sbr.rel (%p279) target = $region46
        $region43: #{custom-call.30} parent=38 // loop_body
          %282 = vst [vmem:[%s276] sm:$0xff] %v277
          %v283 = vld [vmem:[%s275 + $0x8] sm:$0xff]
          %284 = vst [vmem:[%s276 + $0x8] sm:$0xff] %v283
          %v285 = vld [vmem:[%s275 + $0x10] sm:$0xff]
          %286 = vst [vmem:[%s276 + $0x10] sm:$0xff] %v285
          %v287 = vld [vmem:[%s275 + $0x18] sm:$0xff]
          %288 = vst [vmem:[%s276 + $0x18] sm:$0xff] %v287
          %v289 = vld [vmem:[%s275 + $0x20] sm:$0xff]
          %290 = vst [vmem:[%s276 + $0x20] sm:$0xff] %v289
          %v291 = vld [vmem:[%s275 + $0x28] sm:$0xff]
          %292 = vst [vmem:[%s276 + $0x28] sm:$0xff] %v291
          %v293 = vld [vmem:[%s275 + $0x30] sm:$0xff]
          %294 = vst [vmem:[%s276 + $0x30] sm:$0xff] %v293
          %v295 = vld [vmem:[%s275 + $0x38] sm:$0xff]
          %296 = vst [vmem:[%s276 + $0x38] sm:$0xff] %v295
        $region44: #{custom-call.30} parent=38 // loop_footer
          %s297 = scalar_lea.vmem %s275, 64
          %s298 = scalar_lea.vmem %s276, 64
          %v299 = vld [vmem:[%s275 + $0x40] sm:$0xff]
        $region45: #{custom-call.30} parent=38 // loop_footer_branch
          %300 = sbr.rel target = $region41
        $region46: #{custom-call.30} parent=38 // loop_exit
          _
        // While loop
        $region47: #{custom-call.30} parent=38 // loop_pre_header
          _
        $region48: #{custom-call.30} parent=38 // loop_header
          %s301 = sphi %s275, %s309
          %s302 = sphi %s276, %s310
          %v303 = vphi %v277, %v303
          %p304 = scmp.gt.s32.totalorder %s301, %s273
        $region49: #{custom-call.30} parent=38 // loop_header_branch
          %306 = sbr.rel (%p304) target = $region53
        $region50: #{custom-call.30} parent=38 // loop_body
          %v307 = vld [vmem:[%s301] sm:$0xff]
          %308 = vst [vmem:[%s302] sm:$0xff] %v307
        $region51: #{custom-call.30} parent=38 // loop_footer
          %s309 = scalar_lea.vmem %s301, 8
          %s310 = scalar_lea.vmem %s302, 8
        $region52: #{custom-call.30} parent=38 // loop_footer_branch
          %311 = sbr.rel target = $region48
        $region53: #{custom-call.30} parent=38 // loop_exit
          _
      $region39: #{custom-call.30} parent=34 // pred_fallthru
        _
      %s312 = sand.u32 4, 7
      %s313 = sshll.u32 1, %s312
      %s314 = ssub.s32 %s313, 1
      %s315 = smul.u32 %s265, 128
      %s316 = sshra.s32 %s315, 4
      %s317 = scalar_lea.vmem %s1, %s316
      %s318 = smul.u32 %s265, 128
      %s319 = sshra.s32 %s318, 4
      %s320 = scalar_lea.vmem [#allocation3], %s319
      %v321 = vld [vmem:[%s320] sm:%s314]
      %322 = vst [vmem:[%s317] sm:%s314] %v321
    $region35: #{custom-call.30} parent=1 // pred_fallthru
      _
    // Predicated region
    $region54: #{custom-call.30} parent=1 // pred_check
      _
    $region55: #{custom-call.30} parent=1 // pred_check_branch
      %324 = sbr.rel (0) target = $region57
    $region56: #{custom-call.30} parent=1 // pred_region
      %s326 = ssub.s32 16, 16
      %327 = vsyncadd [#allocation6], %s326
      %s328 = sshll.u32 [#allocation5], 4
      %s329 = int_to_ptr.vmem [resolvable:$true] %s328
      %331 = dma.vmem_to_hbm [thread:$0]  %s329, 16, %s2, [#allocation6]
    $region57: #{custom-call.30} parent=1 // pred_fallthru
      _
    // Predicated region
    $region58: #{custom-call.30} parent=1 // pred_check
      _
    $region59: #{custom-call.30} parent=1 // pred_check_branch
      %333 = sbr.rel (0) target = $region61
    $region60: #{custom-call.30} parent=1 // pred_region
      %p335 = scmp.gt.s32.totalorder 1, 0
      // Predicated region
      $region62: #{custom-call.30} parent=60 // pred_check
        %p336 = pneg %p335
      $region63: #{custom-call.30} parent=60 // pred_check_branch
        %338 = sbr.rel (%p336) target = $region65
      $region64: #{custom-call.30} parent=60 // pred_region
        %s339 = sshra.s32 1, 3
        %p340 = scmp.gt.s32.totalorder %s339, 0
        // Predicated region
        $region66: #{custom-call.30} parent=64 // pred_check
          %p341 = pneg %p340
        $region67: #{custom-call.30} parent=64 // pred_check_branch
          %343 = sbr.rel (%p341) target = $region69
        $region68: #{custom-call.30} parent=64 // pred_region
          %s344 = ssub.s32 %s339, 1
          %s345 = smul.u32 %s344, 128
          %s346 = sshra.s32 %s345, 4
          %s347 = scalar_lea.vmem [#allocation8], %s346
          %v348 = vld [vmem:[#allocation8] sm:$0xff]
          // While loop
          $region70: #{custom-call.30} parent=68 // loop_pre_header
            _
          $region71: #{custom-call.30} parent=68 // loop_header
            %s349 = sphi [#allocation8], %s371
            %s350 = sphi %s3, %s372
            %v351 = vphi %v348, %v373
            %s352 = ssub.s32 %s347, 64
            %p353 = scmp.gt.s32.totalorder %s349, %s352
          $region72: #{custom-call.30} parent=68 // loop_header_branch
            %355 = sbr.rel (%p353) target = $region76
          $region73: #{custom-call.30} parent=68 // loop_body
            %356 = vst [vmem:[%s350] sm:$0xff] %v351
            %v357 = vld [vmem:[%s349 + $0x8] sm:$0xff]
            %358 = vst [vmem:[%s350 + $0x8] sm:$0xff] %v357
            %v359 = vld [vmem:[%s349 + $0x10] sm:$0xff]
            %360 = vst [vmem:[%s350 + $0x10] sm:$0xff] %v359
            %v361 = vld [vmem:[%s349 + $0x18] sm:$0xff]
            %362 = vst [vmem:[%s350 + $0x18] sm:$0xff] %v361
            %v363 = vld [vmem:[%s349 + $0x20] sm:$0xff]
            %364 = vst [vmem:[%s350 + $0x20] sm:$0xff] %v363
            %v365 = vld [vmem:[%s349 + $0x28] sm:$0xff]
            %366 = vst [vmem:[%s350 + $0x28] sm:$0xff] %v365
            %v367 = vld [vmem:[%s349 + $0x30] sm:$0xff]
            %368 = vst [vmem:[%s350 + $0x30] sm:$0xff] %v367
            %v369 = vld [vmem:[%s349 + $0x38] sm:$0xff]
            %370 = vst [vmem:[%s350 + $0x38] sm:$0xff] %v369
          $region74: #{custom-call.30} parent=68 // loop_footer
            %s371 = scalar_lea.vmem %s349, 64
            %s372 = scalar_lea.vmem %s350, 64
            %v373 = vld [vmem:[%s349 + $0x40] sm:$0xff]
          $region75: #{custom-call.30} parent=68 // loop_footer_branch
            %374 = sbr.rel target = $region71
          $region76: #{custom-call.30} parent=68 // loop_exit
            _
          // While loop
          $region77: #{custom-call.30} parent=68 // loop_pre_header
            _
          $region78: #{custom-call.30} parent=68 // loop_header
            %s375 = sphi %s349, %s383
            %s376 = sphi %s350, %s384
            %v377 = vphi %v351, %v377
            %p378 = scmp.gt.s32.totalorder %s375, %s347
          $region79: #{custom-call.30} parent=68 // loop_header_branch
            %380 = sbr.rel (%p378) target = $region83
          $region80: #{custom-call.30} parent=68 // loop_body
            %v381 = vld [vmem:[%s375] sm:$0xff]
            %382 = vst [vmem:[%s376] sm:$0xff] %v381
          $region81: #{custom-call.30} parent=68 // loop_footer
            %s383 = scalar_lea.vmem %s375, 8
            %s384 = scalar_lea.vmem %s376, 8
          $region82: #{custom-call.30} parent=68 // loop_footer_branch
            %385 = sbr.rel target = $region78
          $region83: #{custom-call.30} parent=68 // loop_exit
            _
        $region69: #{custom-call.30} parent=64 // pred_fallthru
          _
        %s386 = sand.u32 1, 7
        %s387 = sshll.u32 1, %s386
        %s388 = ssub.s32 %s387, 1
        %s389 = smul.u32 %s339, 128
        %s390 = sshra.s32 %s389, 4
        %s391 = scalar_lea.vmem %s3, %s390
        %s392 = smul.u32 %s339, 128
        %s393 = sshra.s32 %s392, 4
        %s394 = scalar_lea.vmem [#allocation8], %s393
        %v395 = vld [vmem:[%s394] sm:%s388]
        %396 = vst [vmem:[%s391] sm:%s388] %v395
      $region65: #{custom-call.30} parent=60 // pred_fallthru
        _
    $region61: #{custom-call.30} parent=1 // pred_fallthru
      _
    // Predicated region
    $region84: #{custom-call.30} parent=1 // pred_check
      _
    $region85: #{custom-call.30} parent=1 // pred_check_branch
      %398 = sbr.rel (0) target = $region87
    $region86: #{custom-call.30} parent=1 // pred_region
      %399 = dma.done [#allocation6], 16
    $region87: #{custom-call.30} parent=1 // pred_fallthru
      _
    // Predicated region
    $region88: #{custom-call.30} parent=1 // pred_check
      _
    $region89: #{custom-call.30} parent=1 // pred_check_branch
      %401 = sbr.rel (0) target = $region91
    $region90: #{custom-call.30} parent=1 // pred_region
      _
    $region91: #{custom-call.30} parent=1 // pred_fallthru
      _
    %402 = vsyncpa [#allocation6], 1

// kernel: custom-call.32
$region0: #{custom-call.32}
  %s0 = inlined_call_operand.vmem [shape: f32[1,4,4], index: 0, kind: input, shape index: {}]
  %s1 = inlined_call_operand.vmem [shape: f32[1,4,4], index: 1, kind: output, shape index: {}]
  $region1: #{custom-call.32} parent=0
    #allocation0 [shape = 'u8[4096]{0}', space=vmem, size = 0x1000, scoped, tag = 'operand span for operand 0']
    #allocation1 [shape = 'u8[2048]{0}', space=vmem, size = 0x800, scoped, tag = 'packed  for operand 0']
    #allocation2 [shape = 'u8[4096]{0}', space=vmem, size = 0x1000, scoped, tag = 'operand span for operand 1']
    #allocation3 [shape = 'u8[2048]{0}', space=vmem, size = 0x800, scoped, tag = 'packed  for operand 1']
    #allocation4 [shape = 'f32[4,4]{1,0}', space=vmem, size = 0x1000, scoped, tag = 'rescaled input a']
    // Predicated region
    $region2: #{custom-call.32} parent=1 // pred_check
      _
    $region3: #{custom-call.32} parent=1 // pred_check_branch
      %3 = sbr.rel (0) target = $region5
    $region4: #{custom-call.32} parent=1 // pred_region
      // Predicated region
      $region6: #{custom-call.32} parent=4 // pred_check
        _
      $region7: #{custom-call.32} parent=4 // pred_check_branch
        %5 = sbr.rel target = $region9
      $region8: #{custom-call.32} parent=4 // pred_region
        // Predicated region
        $region21: #{custom-call.32} parent=8 // pred_check
          _
        $region22: #{custom-call.32} parent=8 // pred_check_branch
          %21 = sbr.rel (0) target = $region24
        $region23: #{custom-call.32} parent=8 // pred_region
          %s23 = ssub.s32 16, 1
          loop: start=0, step=1, limit=1
          $region25: #{custom-call.32} parent=23 // loop_pre_header
            _
          $region26: #{custom-call.32} parent=23 // loop_header
            %s25 = sphi 0, %s29
            %p26 = scmp.ge.s32.totalorder %s25, 1
            %s30 = sphi %s0, %s0
            %s31 = sphi [#allocation1], [#allocation1]
          $region27: #{custom-call.32} parent=23 // loop_header_branch
            %28 = sbr.rel (%p26) target = $region31
          $region28: #{custom-call.32} parent=23 // loop_body
            %v32 = vld [vmem:[%s30] sm:%s23]
            %33 = vst [vmem:[%s31] sm:%s23] %v32
          $region29: #{custom-call.32} parent=23 // loop_footer
            %s29 = sadd.s32 1, %s25
          $region30: #{custom-call.32} parent=23 // loop_footer_branch
            %24 = sbr.rel target = $region26
          $region31: #{custom-call.32} parent=23 // loop_exit
            _
        $region24: #{custom-call.32} parent=8 // pred_fallthru
          _
      $region9: #{custom-call.32} parent=4 // pred_fallthru
        _
      // Predicated region
      $region10: #{custom-call.32} parent=4 // pred_check
        _
      $region11: #{custom-call.32} parent=4 // pred_check_branch
        %7 = sbr.rel (0) target = $region13
      $region12: #{custom-call.32} parent=4 // pred_region
        %s9 = ssub.s32 16, 1
        loop: start=0, step=1, limit=1
        $region14: #{custom-call.32} parent=12 // loop_pre_header
          _
        $region15: #{custom-call.32} parent=12 // loop_header
          %s11 = sphi 0, %s15
          %p12 = scmp.ge.s32.totalorder %s11, 1
          %s16 = sphi %s0, %s0
          %s17 = sphi [#allocation1], [#allocation1]
        $region16: #{custom-call.32} parent=12 // loop_header_branch
          %14 = sbr.rel (%p12) target = $region20
        $region17: #{custom-call.32} parent=12 // loop_body
          %v18 = vld [vmem:[%s16] sm:%s9]
          %19 = vst [vmem:[%s17] sm:%s9] %v18
        $region18: #{custom-call.32} parent=12 // loop_footer
          %s15 = sadd.s32 1, %s11
        $region19: #{custom-call.32} parent=12 // loop_footer_branch
          %10 = sbr.rel target = $region15
        $region20: #{custom-call.32} parent=12 // loop_exit
          _
      $region13: #{custom-call.32} parent=4 // pred_fallthru
        _
    $region5: #{custom-call.32} parent=1 // pred_fallthru
      _
    %34 = vnop
    %s36 = sshll.u32 1, 4
    %s37 = ssub.s32 %s36, 1
    %v38 = vld [vmem:[#allocation1] sm:%s37]
    %39 = vst [vmem:[#allocation0] sm:%s37] %v38
    %v40 = vlaneseq
    %v41 = vand.u32 %v40, 127
    %vm42 = vcmp.lt.s32.totalorder %v41, 4
    %v43 = vlaneseq
    %v44 = vshrl.u32 %v43, 7
    %vm46 = vcmp.eq.s32.totalorder %v44, %v41
    %v47 = vld [vmem:[#allocation0] sm:$0xff]
    %v48 = vsel %vm46, %v47, 0.0
    %49 = vadd.xlane.f32.xlu0 %v48
    %v50 = vpop.xlane.xlu0 %49
    %vm51 = vcmp.ge.s32.totalorder %v44, %v41
    %vm52 = vmand %vm51, %vm42
    %v53 = vsel %vm52, %v47, 0.0
    %v54 = vrcp.pop %v50
    %v55 = vmul.f32 %v53, %v54
    %56 = vst [vmem:[#allocation4] sm:$0xff] %v55
    %v57 = vlaneseq
    %v58 = vand.u32 %v57, 127
    %v59 = vlaneseq
    %v60 = vshrl.u32 %v59, 7
    %vm62 = vcmp.eq.s32.totalorder %v58, %v60
    %v63 = vlaneseq
    %v64 = vand.u32 %v63, 127
    %vm65 = vcmp.eq.s32.totalorder %v64, 0
    %v66 = vsel %vm65, 1.0, -1.0
    %v67 = vsel %vm62, %v66, 0.0
    %s68 = scalar_lea.vmem [#allocation4], 1
    %v69 = vld [vmem:[%s68] ss:$0 sm:$0xff]
    %v70 = vxor.u32 %v69, 2147483648
    %v71 = vlaneseq
    %v72 = vand.u32 %v71, 127
    %vm73 = vcmp.eq.s32.totalorder %v72, 1
    %v74 = vmul.f32 %v70, %v67
    %75 = vadd.xlane.f32.xlu0 %v74
    %v76 = vpop.xlane.xlu0 %75
    %v77 = vsel %vm73, %v76, %v67
    %s78 = scalar_lea.vmem [#allocation4], 2
    %v79 = vld [vmem:[%s78] ss:$0 sm:$0xff]
    %v80 = vxor.u32 %v79, 2147483648
    %v81 = vlaneseq
    %v82 = vand.u32 %v81, 127
    %vm83 = vcmp.eq.s32.totalorder %v82, 2
    %v84 = vmul.f32 %v80, %v77
    %85 = vadd.xlane.f32.xlu0 %v84
    %v86 = vpop.xlane.xlu0 %85
    %v87 = vsel %vm83, %v86, %v77
    %s88 = scalar_lea.vmem [#allocation4], 3
    %v89 = vld [vmem:[%s88] ss:$0 sm:$0xff]
    %v90 = vxor.u32 %v89, 2147483648
    %v91 = vlaneseq
    %v92 = vand.u32 %v91, 127
    %vm93 = vcmp.eq.s32.totalorder %v92, 3
    %v94 = vmul.f32 %v90, %v87
    %95 = vadd.xlane.f32.xlu0 %v94
    %v96 = vpop.xlane.xlu0 %95
    %v97 = vsel %vm93, %v96, %v87
    %v98 = vrcp.pop %v50
    %v99 = vmul.f32 %v97, %v98
    %vm100 = vweird.f32 %v50
    %v101 = vsel %vm100, %v97, %v99
    %102 = vst [vmem:[#allocation2] sm:$0xff] %v101
    %s104 = sshll.u32 1, 4
    %s105 = ssub.s32 %s104, 1
    %v107 = vld [vmem:[#allocation2] sm:%s105]
    %s108 = sshll.u32 1, 4
    %s109 = ssub.s32 %s108, 1
    %110 = vst [vmem:[#allocation3] sm:%s109] %v107
    // Predicated region
    $region32: #{custom-call.32} parent=1 // pred_check
      _
    $region33: #{custom-call.32} parent=1 // pred_check_branch
      %112 = sbr.rel (0) target = $region35
    $region34: #{custom-call.32} parent=1 // pred_region
      // Predicated region
      $region36: #{custom-call.32} parent=34 // pred_check
        _
      $region37: #{custom-call.32} parent=34 // pred_check_branch
        %114 = sbr.rel target = $region39
      $region38: #{custom-call.32} parent=34 // pred_region
        // Predicated region
        $region51: #{custom-call.32} parent=38 // pred_check
          _
        $region52: #{custom-call.32} parent=38 // pred_check_branch
          %130 = sbr.rel (0) target = $region54
        $region53: #{custom-call.32} parent=38 // pred_region
          %s132 = ssub.s32 16, 1
          loop: start=0, step=1, limit=1
          $region55: #{custom-call.32} parent=53 // loop_pre_header
            _
          $region56: #{custom-call.32} parent=53 // loop_header
            %s134 = sphi 0, %s138
            %p135 = scmp.ge.s32.totalorder %s134, 1
            %s139 = sphi [#allocation3], [#allocation3]
            %s140 = sphi %s1, %s1
          $region57: #{custom-call.32} parent=53 // loop_header_branch
            %137 = sbr.rel (%p135) target = $region61
          $region58: #{custom-call.32} parent=53 // loop_body
            %v141 = vld [vmem:[%s139] sm:%s132]
            %142 = vst [vmem:[%s140] sm:%s132] %v141
          $region59: #{custom-call.32} parent=53 // loop_footer
            %s138 = sadd.s32 1, %s134
          $region60: #{custom-call.32} parent=53 // loop_footer_branch
            %133 = sbr.rel target = $region56
          $region61: #{custom-call.32} parent=53 // loop_exit
            _
        $region54: #{custom-call.32} parent=38 // pred_fallthru
          _
      $region39: #{custom-call.32} parent=34 // pred_fallthru
        _
      // Predicated region
      $region40: #{custom-call.32} parent=34 // pred_check
        _
      $region41: #{custom-call.32} parent=34 // pred_check_branch
        %116 = sbr.rel (0) target = $region43
      $region42: #{custom-call.32} parent=34 // pred_region
        %s118 = ssub.s32 16, 1
        loop: start=0, step=1, limit=1
        $region44: #{custom-call.32} parent=42 // loop_pre_header
          _
        $region45: #{custom-call.32} parent=42 // loop_header
          %s120 = sphi 0, %s124
          %p121 = scmp.ge.s32.totalorder %s120, 1
          %s125 = sphi [#allocation3], [#allocation3]
          %s126 = sphi %s1, %s1
        $region46: #{custom-call.32} parent=42 // loop_header_branch
          %123 = sbr.rel (%p121) target = $region50
        $region47: #{custom-call.32} parent=42 // loop_body
          %v127 = vld [vmem:[%s125] sm:%s118]
          %128 = vst [vmem:[%s126] sm:%s118] %v127
        $region48: #{custom-call.32} parent=42 // loop_footer
          %s124 = sadd.s32 1, %s120
        $region49: #{custom-call.32} parent=42 // loop_footer_branch
          %119 = sbr.rel target = $region45
        $region50: #{custom-call.32} parent=42 // loop_exit
          _
      $region43: #{custom-call.32} parent=34 // pred_fallthru
        _
    $region35: #{custom-call.32} parent=1 // pred_fallthru
      _
    %143 = vnop

// kernel: custom-call.31
$region0: #{custom-call.31}
  %s0 = inlined_call_operand.vmem [shape: f32[1,4,4], index: 0, kind: input, shape index: {}]
  %s1 = inlined_call_operand.vmem [shape: f32[1,4,4], index: 1, kind: output, shape index: {}]
  $region1: #{custom-call.31} parent=0
    #allocation0 [shape = 'u8[4096]{0}', space=vmem, size = 0x1000, scoped, tag = 'operand span for operand 0']
    #allocation1 [shape = 'u8[2048]{0}', space=vmem, size = 0x800, scoped, tag = 'packed  for operand 0']
    #allocation2 [shape = 'u8[4096]{0}', space=vmem, size = 0x1000, scoped, tag = 'operand span for operand 1']
    #allocation3 [shape = 'u8[2048]{0}', space=vmem, size = 0x800, scoped, tag = 'packed  for operand 1']
    #allocation4 [shape = 'f32[4,4]{1,0}', space=vmem, size = 0x1000, scoped, tag = 'rescaled input a']
    // Predicated region
    $region2: #{custom-call.31} parent=1 // pred_check
      _
    $region3: #{custom-call.31} parent=1 // pred_check_branch
      %3 = sbr.rel (0) target = $region5
    $region4: #{custom-call.31} parent=1 // pred_region
      // Predicated region
      $region6: #{custom-call.31} parent=4 // pred_check
        _
      $region7: #{custom-call.31} parent=4 // pred_check_branch
        %5 = sbr.rel target = $region9
      $region8: #{custom-call.31} parent=4 // pred_region
        // Predicated region
        $region21: #{custom-call.31} parent=8 // pred_check
          _
        $region22: #{custom-call.31} parent=8 // pred_check_branch
          %21 = sbr.rel (0) target = $region24
        $region23: #{custom-call.31} parent=8 // pred_region
          %s23 = ssub.s32 16, 1
          loop: start=0, step=1, limit=1
          $region25: #{custom-call.31} parent=23 // loop_pre_header
            _
          $region26: #{custom-call.31} parent=23 // loop_header
            %s25 = sphi 0, %s29
            %p26 = scmp.ge.s32.totalorder %s25, 1
            %s30 = sphi %s0, %s0
            %s31 = sphi [#allocation1], [#allocation1]
          $region27: #{custom-call.31} parent=23 // loop_header_branch
            %28 = sbr.rel (%p26) target = $region31
          $region28: #{custom-call.31} parent=23 // loop_body
            %v32 = vld [vmem:[%s30] sm:%s23]
            %33 = vst [vmem:[%s31] sm:%s23] %v32
          $region29: #{custom-call.31} parent=23 // loop_footer
            %s29 = sadd.s32 1, %s25
          $region30: #{custom-call.31} parent=23 // loop_footer_branch
            %24 = sbr.rel target = $region26
          $region31: #{custom-call.31} parent=23 // loop_exit
            _
        $region24: #{custom-call.31} parent=8 // pred_fallthru
          _
      $region9: #{custom-call.31} parent=4 // pred_fallthru
        _
      // Predicated region
      $region10: #{custom-call.31} parent=4 // pred_check
        _
      $region11: #{custom-call.31} parent=4 // pred_check_branch
        %7 = sbr.rel (0) target = $region13
      $region12: #{custom-call.31} parent=4 // pred_region
        %s9 = ssub.s32 16, 1
        loop: start=0, step=1, limit=1
        $region14: #{custom-call.31} parent=12 // loop_pre_header
          _
        $region15: #{custom-call.31} parent=12 // loop_header
          %s11 = sphi 0, %s15
          %p12 = scmp.ge.s32.totalorder %s11, 1
          %s16 = sphi %s0, %s0
          %s17 = sphi [#allocation1], [#allocation1]
        $region16: #{custom-call.31} parent=12 // loop_header_branch
          %14 = sbr.rel (%p12) target = $region20
        $region17: #{custom-call.31} parent=12 // loop_body
          %v18 = vld [vmem:[%s16] sm:%s9]
          %19 = vst [vmem:[%s17] sm:%s9] %v18
        $region18: #{custom-call.31} parent=12 // loop_footer
          %s15 = sadd.s32 1, %s11
        $region19: #{custom-call.31} parent=12 // loop_footer_branch
          %10 = sbr.rel target = $region15
        $region20: #{custom-call.31} parent=12 // loop_exit
          _
      $region13: #{custom-call.31} parent=4 // pred_fallthru
        _
    $region5: #{custom-call.31} parent=1 // pred_fallthru
      _
    %34 = vnop
    %s36 = sshll.u32 1, 4
    %s37 = ssub.s32 %s36, 1
    %v38 = vld [vmem:[#allocation1] sm:%s37]
    %39 = vst [vmem:[#allocation0] sm:%s37] %v38
    %v40 = vlaneseq
    %v41 = vand.u32 %v40, 127
    %vm42 = vcmp.lt.s32.totalorder %v41, 4
    %v43 = vlaneseq
    %v44 = vshrl.u32 %v43, 7
    %vm46 = vcmp.eq.s32.totalorder %v44, %v41
    %v47 = vld [vmem:[#allocation0] sm:$0xff]
    %v48 = vsel %vm46, %v47, 0.0
    %49 = vadd.xlane.f32.xlu0 %v48
    %v50 = vpop.xlane.xlu0 %49
    %vm51 = vcmp.le.s32.totalorder %v44, %v41
    %vm52 = vmand %vm51, %vm42
    %v53 = vsel %vm52, %v47, 0.0
    %v54 = vrcp.pop %v50
    %v55 = vmul.f32 %v53, %v54
    %56 = vst [vmem:[#allocation4] sm:$0xff] %v55
    %v57 = vlaneseq
    %v58 = vand.u32 %v57, 127
    %v59 = vlaneseq
    %v60 = vshrl.u32 %v59, 7
    %vm62 = vcmp.eq.s32.totalorder %v58, %v60
    %v63 = vlaneseq
    %v64 = vand.u32 %v63, 127
    %vm65 = vcmp.eq.s32.totalorder %v64, 3
    %v66 = vsel %vm65, 1.0, -1.0
    %v67 = vsel %vm62, %v66, 0.0
    %s68 = scalar_lea.vmem [#allocation4], 2
    %v69 = vld [vmem:[%s68] ss:$0 sm:$0xff]
    %v70 = vxor.u32 %v69, 2147483648
    %v71 = vlaneseq
    %v72 = vand.u32 %v71, 127
    %vm73 = vcmp.eq.s32.totalorder %v72, 2
    %v74 = vmul.f32 %v70, %v67
    %75 = vadd.xlane.f32.xlu0 %v74
    %v76 = vpop.xlane.xlu0 %75
    %v77 = vsel %vm73, %v76, %v67
    %s78 = scalar_lea.vmem [#allocation4], 1
    %v79 = vld [vmem:[%s78] ss:$0 sm:$0xff]
    %v80 = vxor.u32 %v79, 2147483648
    %v81 = vlaneseq
    %v82 = vand.u32 %v81, 127
    %vm83 = vcmp.eq.s32.totalorder %v82, 1
    %v84 = vmul.f32 %v80, %v77
    %85 = vadd.xlane.f32.xlu0 %v84
    %v86 = vpop.xlane.xlu0 %85
    %v87 = vsel %vm83, %v86, %v77
    %v88 = vld [vmem:[#allocation4] ss:$0 sm:$0xff]
    %v89 = vxor.u32 %v88, 2147483648
    %v90 = vlaneseq
    %v91 = vand.u32 %v90, 127
    %vm92 = vcmp.eq.s32.totalorder %v91, 0
    %v93 = vmul.f32 %v89, %v87
    %94 = vadd.xlane.f32.xlu0 %v93
    %v95 = vpop.xlane.xlu0 %94
    %v96 = vsel %vm92, %v95, %v87
    %v97 = vrcp.pop %v50
    %v98 = vmul.f32 %v96, %v97
    %vm99 = vweird.f32 %v50
    %v100 = vsel %vm99, %v96, %v98
    %101 = vst [vmem:[#allocation2] sm:$0xff] %v100
    %s103 = sshll.u32 1, 4
    %s104 = ssub.s32 %s103, 1
    %v106 = vld [vmem:[#allocation2] sm:%s104]
    %s107 = sshll.u32 1, 4
    %s108 = ssub.s32 %s107, 1
    %109 = vst [vmem:[#allocation3] sm:%s108] %v106
    // Predicated region
    $region32: #{custom-call.31} parent=1 // pred_check
      _
    $region33: #{custom-call.31} parent=1 // pred_check_branch
      %111 = sbr.rel (0) target = $region35
    $region34: #{custom-call.31} parent=1 // pred_region
      // Predicated region
      $region36: #{custom-call.31} parent=34 // pred_check
        _
      $region37: #{custom-call.31} parent=34 // pred_check_branch
        %113 = sbr.rel target = $region39
      $region38: #{custom-call.31} parent=34 // pred_region
        // Predicated region
        $region51: #{custom-call.31} parent=38 // pred_check
          _
        $region52: #{custom-call.31} parent=38 // pred_check_branch
          %129 = sbr.rel (0) target = $region54
        $region53: #{custom-call.31} parent=38 // pred_region
          %s131 = ssub.s32 16, 1
          loop: start=0, step=1, limit=1
          $region55: #{custom-call.31} parent=53 // loop_pre_header
            _
          $region56: #{custom-call.31} parent=53 // loop_header
            %s133 = sphi 0, %s137
            %p134 = scmp.ge.s32.totalorder %s133, 1
            %s138 = sphi [#allocation3], [#allocation3]
            %s139 = sphi %s1, %s1
          $region57: #{custom-call.31} parent=53 // loop_header_branch
            %136 = sbr.rel (%p134) target = $region61
          $region58: #{custom-call.31} parent=53 // loop_body
            %v140 = vld [vmem:[%s138] sm:%s131]
            %141 = vst [vmem:[%s139] sm:%s131] %v140
          $region59: #{custom-call.31} parent=53 // loop_footer
            %s137 = sadd.s32 1, %s133
          $region60: #{custom-call.31} parent=53 // loop_footer_branch
            %132 = sbr.rel target = $region56
          $region61: #{custom-call.31} parent=53 // loop_exit
            _
        $region54: #{custom-call.31} parent=38 // pred_fallthru
          _
      $region39: #{custom-call.31} parent=34 // pred_fallthru
        _
      // Predicated region
      $region40: #{custom-call.31} parent=34 // pred_check
        _
      $region41: #{custom-call.31} parent=34 // pred_check_branch
        %115 = sbr.rel (0) target = $region43
      $region42: #{custom-call.31} parent=34 // pred_region
        %s117 = ssub.s32 16, 1
        loop: start=0, step=1, limit=1
        $region44: #{custom-call.31} parent=42 // loop_pre_header
          _
        $region45: #{custom-call.31} parent=42 // loop_header
          %s119 = sphi 0, %s123
          %p120 = scmp.ge.s32.totalorder %s119, 1
          %s124 = sphi [#allocation3], [#allocation3]
          %s125 = sphi %s1, %s1
        $region46: #{custom-call.31} parent=42 // loop_header_branch
          %122 = sbr.rel (%p120) target = $region50
        $region47: #{custom-call.31} parent=42 // loop_body
          %v126 = vld [vmem:[%s124] sm:%s117]
          %127 = vst [vmem:[%s125] sm:%s117] %v126
        $region48: #{custom-call.31} parent=42 // loop_footer
          %s123 = sadd.s32 1, %s119
        $region49: #{custom-call.31} parent=42 // loop_footer_branch
          %118 = sbr.rel target = $region45
        $region50: #{custom-call.31} parent=42 // loop_exit
          _
      $region43: #{custom-call.31} parent=34 // pred_fallthru
        _
    $region35: #{custom-call.31} parent=1 // pred_fallthru
      _
    %142 = vnop

// kernel: custom-call.22
$region0: #{custom-call.22}
  %s0 = inlined_call_operand.vmem [shape: f32[8,8], index: 0, kind: input, shape index: {}]
  %s1 = inlined_call_operand.vmem [shape: f32[8,8], index: 1, kind: output, shape index: {0}]
  %s2 = inlined_call_operand.hbm [shape: s32[8], index: 2, kind: output, shape index: {1}]
  %s3 = inlined_call_operand.vmem [shape: s32[8], index: 3, kind: output, shape index: {2}]
  %4 = xla_tuple %s1, %s2, %s3
  $region1: #{custom-call.22} parent=0
    #allocation0 [shape = 'u8[4096]{0}', space=vmem, size = 0x1000, scoped, tag = 'operand span for operand 0']
    #allocation1 [shape = 'u8[4096]{0}', space=vmem, size = 0x1000, scoped, tag = 'operand span for operand 1']
    #allocation2 [shape = 'u8[4096]{0}', space=vmem, size = 0x1000, scoped, tag = 'operand span for operand 2']
    #allocation3 [shape = 'u8[512]{0}', space=vmem, size = 0x400, scoped, tag = 'packed  for operand 2']
    #allocation4 [shape = 's32[1]{0}', space=sflag, size = 0x4, scoped, tag = 'scoped memory for custom-call.22']
    #allocation5 [shape = 'u8[4096]{0}', space=vmem, size = 0x1000, scoped, tag = 'operand span for operand 3']
    #allocation6 [shape = 'u8[512]{0}', space=vmem, size = 0x400, scoped, tag = 'packed  for operand 3']
    #allocation7 [shape = 's32[8,128]{1,0}', space=vmem, size = 0x1000, scoped, tag = 'scratch for permutations']
    %5 = vsyncpa [#allocation4], 0
    %p7 = scmp.gt.s32.totalorder 8, 0
    // Predicated region
    $region2: #{custom-call.22} parent=1 // pred_check
      %p8 = pneg %p7
    $region3: #{custom-call.22} parent=1 // pred_check_branch
      %10 = sbr.rel (%p8) target = $region5
    $region4: #{custom-call.22} parent=1 // pred_region
      %s11 = sshra.s32 8, 3
      %p12 = scmp.gt.s32.totalorder %s11, 0
      // Predicated region
      $region6: #{custom-call.22} parent=4 // pred_check
        %p13 = pneg %p12
      $region7: #{custom-call.22} parent=4 // pred_check_branch
        %15 = sbr.rel (%p13) target = $region9
      $region8: #{custom-call.22} parent=4 // pred_region
        %s16 = ssub.s32 %s11, 1
        %s17 = smul.u32 %s16, 128
        %s18 = sshra.s32 %s17, 4
        %s19 = scalar_lea.vmem %s0, %s18
        %v20 = vld [vmem:[%s0] sm:$0xff]
        // While loop
        $region10: #{custom-call.22} parent=8 // loop_pre_header
          _
        $region11: #{custom-call.22} parent=8 // loop_header
          %s21 = sphi %s0, %s43
          %s22 = sphi [#allocation0], %s44
          %v23 = vphi %v20, %v45
          %s24 = ssub.s32 %s19, 64
          %p25 = scmp.gt.s32.totalorder %s21, %s24
        $region12: #{custom-call.22} parent=8 // loop_header_branch
          %27 = sbr.rel (%p25) target = $region16
        $region13: #{custom-call.22} parent=8 // loop_body
          %28 = vst [vmem:[%s22] sm:$0xff] %v23
          %v29 = vld [vmem:[%s21 + $0x8] sm:$0xff]
          %30 = vst [vmem:[%s22 + $0x8] sm:$0xff] %v29
          %v31 = vld [vmem:[%s21 + $0x10] sm:$0xff]
          %32 = vst [vmem:[%s22 + $0x10] sm:$0xff] %v31
          %v33 = vld [vmem:[%s21 + $0x18] sm:$0xff]
          %34 = vst [vmem:[%s22 + $0x18] sm:$0xff] %v33
          %v35 = vld [vmem:[%s21 + $0x20] sm:$0xff]
          %36 = vst [vmem:[%s22 + $0x20] sm:$0xff] %v35
          %v37 = vld [vmem:[%s21 + $0x28] sm:$0xff]
          %38 = vst [vmem:[%s22 + $0x28] sm:$0xff] %v37
          %v39 = vld [vmem:[%s21 + $0x30] sm:$0xff]
          %40 = vst [vmem:[%s22 + $0x30] sm:$0xff] %v39
          %v41 = vld [vmem:[%s21 + $0x38] sm:$0xff]
          %42 = vst [vmem:[%s22 + $0x38] sm:$0xff] %v41
        $region14: #{custom-call.22} parent=8 // loop_footer
          %s43 = scalar_lea.vmem %s21, 64
          %s44 = scalar_lea.vmem %s22, 64
          %v45 = vld [vmem:[%s21 + $0x40] sm:$0xff]
        $region15: #{custom-call.22} parent=8 // loop_footer_branch
          %46 = sbr.rel target = $region11
        $region16: #{custom-call.22} parent=8 // loop_exit
          _
        // While loop
        $region17: #{custom-call.22} parent=8 // loop_pre_header
          _
        $region18: #{custom-call.22} parent=8 // loop_header
          %s47 = sphi %s21, %s55
          %s48 = sphi %s22, %s56
          %v49 = vphi %v23, %v49
          %p50 = scmp.gt.s32.totalorder %s47, %s19
        $region19: #{custom-call.22} parent=8 // loop_header_branch
          %52 = sbr.rel (%p50) target = $region23
        $region20: #{custom-call.22} parent=8 // loop_body
          %v53 = vld [vmem:[%s47] sm:$0xff]
          %54 = vst [vmem:[%s48] sm:$0xff] %v53
        $region21: #{custom-call.22} parent=8 // loop_footer
          %s55 = scalar_lea.vmem %s47, 8
          %s56 = scalar_lea.vmem %s48, 8
        $region22: #{custom-call.22} parent=8 // loop_footer_branch
          %57 = sbr.rel target = $region18
        $region23: #{custom-call.22} parent=8 // loop_exit
          _
      $region9: #{custom-call.22} parent=4 // pred_fallthru
        _
      %s58 = sand.u32 8, 7
      %s59 = sshll.u32 1, %s58
      %s60 = ssub.s32 %s59, 1
      %s61 = smul.u32 %s11, 128
      %s62 = sshra.s32 %s61, 4
      %s63 = scalar_lea.vmem [#allocation0], %s62
      %s64 = smul.u32 %s11, 128
      %s65 = sshra.s32 %s64, 4
      %s66 = scalar_lea.vmem %s0, %s65
      %v67 = vld [vmem:[%s66] sm:%s60]
      %68 = vst [vmem:[%s63] sm:%s60] %v67
    $region5: #{custom-call.22} parent=1 // pred_fallthru
      _
    %v69 = vld [vmem:[#allocation0] sm:$0xff]
    %70 = vst [vmem:[#allocation1] sm:$0xff] %v69
    %71 = vst [vmem:[#allocation2] sm:$0x1] 0
    %v72 = vlaneseq
    %v73 = vshrl.u32 %v72, 7
    %v74 = vmov %v73
    %76 = vst [vmem:[#allocation7] sm:$0xff] %v74
    loop: start=0, step=1, limit=8
    $region25: #{custom-call.22} parent=1 // loop_pre_header
      _
    $region26: #{custom-call.22} parent=1 // loop_header
      %s78 = sphi 0, %s82
      %p79 = scmp.ge.s32.totalorder %s78, 8
    $region27: #{custom-call.22} parent=1 // loop_header_branch
      %81 = sbr.rel (%p79) target = $region31
    $region28: #{custom-call.22} parent=1 // loop_body
      %v83 = vstv %s78
      %v84 = vlaneseq
      %v85 = vshrl.u32 %v84, 7
      %v86 = vmov %v85
      %v87 = vld [vmem:[#allocation1] sm:$0xff]
      %v88 = vand.u32 2147483647, %v87
      %v90 = vstv %s78
      %vm91 = vcmp.ge.s32.totalorder %v86, %v90
      %vm92 = vcmp.lt.s32.totalorder %v86, 8
      %vm93 = vmand %vm91, %vm92
      %vm94 = vcmp.lt.f32.partialorder -inf, %v88
      %vm95 = vmand %vm93, %vm94
      %v96 = vsel %vm95, %v86, %v83
      %v97 = vsel %vm95, %v88, -inf
      %v98 = vrot.slane %v97, 1
      %v99 = vrot.slane %v96, 1
      %vm100 = vcmp.ge.f32.partialorder %v98, %v97
      %v101 = vsel %vm100, %v98, %v97
      %v102 = vsel %vm100, %v99, %v96
      %v103 = vrot.slane %v98, 1
      %v104 = vrot.slane %v99, 1
      %vm105 = vcmp.ge.f32.partialorder %v103, %v101
      %v106 = vsel %vm105, %v103, %v101
      %v107 = vsel %vm105, %v104, %v102
      %v108 = vrot.slane %v103, 1
      %v109 = vrot.slane %v104, 1
      %vm110 = vcmp.ge.f32.partialorder %v108, %v106
      %v111 = vsel %vm110, %v108, %v106
      %v112 = vsel %vm110, %v109, %v107
      %v113 = vrot.slane %v108, 1
      %v114 = vrot.slane %v109, 1
      %vm115 = vcmp.ge.f32.partialorder %v113, %v111
      %v116 = vsel %vm115, %v113, %v111
      %v117 = vsel %vm115, %v114, %v112
      %v118 = vrot.slane %v113, 1
      %v119 = vrot.slane %v114, 1
      %vm120 = vcmp.ge.f32.partialorder %v118, %v116
      %v121 = vsel %vm120, %v118, %v116
      %v122 = vsel %vm120, %v119, %v117
      %v123 = vrot.slane %v118, 1
      %v124 = vrot.slane %v119, 1
      %vm125 = vcmp.ge.f32.partialorder %v123, %v121
      %v126 = vsel %vm125, %v123, %v121
      %v127 = vsel %vm125, %v124, %v122
      %v128 = vrot.slane %v123, 1
      %v129 = vrot.slane %v124, 1
      %vm130 = vcmp.ge.f32.partialorder %v128, %v126
      %v131 = vsel %vm130, %v128, %v126
      %v132 = vsel %vm130, %v129, %v127
      %s133 = ssub.s32 128, %s78
      %134 = vrot.lane.b32.xlu0 %v132, %s133
      %v135 = vpop.permute.xlu0 %134
      %s136 = vtos %v135
      %v137 = vstv %s78
      %v138 = vlaneseq
      %v139 = vand.u32 %v138, 127
      %vm140 = vcmp.eq.s32.totalorder %v139, %v137
      %v141 = vstv %s136
      %v142 = vld [vmem:[#allocation2] ss:$0 sm:$0xff]
      %v143 = vsel %vm140, %v141, %v142
      %144 = vst [vmem:[#allocation2] sm:$0x1] %v143
      %s145 = scalar_lea.vmem [#allocation1], %s78
      %s146 = scalar_lea.vmem [#allocation1], %s136
      %v147 = vld [vmem:[%s145] ss:$0 sm:$0xff]
      %v148 = vld [vmem:[%s146] ss:$0 sm:$0xff]
      %149 = vst [vmem:[%s146] sm:$0x1] %v147
      %150 = vst [vmem:[%s145] sm:$0x1] %v148
      %s151 = scalar_lea.vmem [#allocation7], %s78
      %s152 = scalar_lea.vmem [#allocation7], %s136
      %v153 = vld [vmem:[%s151] ss:$0 sm:$0xff]
      %v154 = vld [vmem:[%s152] ss:$0 sm:$0xff]
      %155 = vst [vmem:[%s152] sm:$0x1] %v153
      %156 = vst [vmem:[%s151] sm:$0x1] %v154
      %vm157 = vcmp.ne.f32.partialorder %v148, 0.0
      %vm158 = vmand %vm140, %vm157
      %v159 = vsel %vm158, %v148, 1.0
      %v160 = vlaneseq
      %v161 = vand.u32 %v160, 127
      %v162 = vstv %s78
      %vm163 = vcmp.gt.s32.totalorder %v161, %v162
      %v164 = vsel %vm163, %v148, 0.0
      %v165 = vlaneseq
      %v166 = vshrl.u32 %v165, 7
      %v167 = vmov %v166
      %v168 = vld [vmem:[#allocation1] sm:$0xff]
      %v170 = vstv %s78
      %vm171 = vcmp.gt.s32.totalorder %v167, %v170
      %v172 = vsel %vm171, %v159, 1.0
      %v173 = vrcp.pop %v172
      %v174 = vmul.f32 %v168, %v173
      %vm175 = vmand %vm171, %vm140
      %v176 = vsel %vm175, %v174, 0.0
      %177 = vadd.xlane.f32.xlu0 %v176
      %v178 = vpop.xlane.xlu0 %177
      %v179 = vmul.f32 %v178, %v164
      %v180 = vsub.f32 %v174, %v179
      %181 = vst [vmem:[#allocation1] sm:$0xff] %v180
    $region29: #{custom-call.22} parent=1 // loop_footer
      %s82 = sadd.s32 1, %s78
    $region30: #{custom-call.22} parent=1 // loop_footer_branch
      %77 = sbr.rel target = $region26
    $region31: #{custom-call.22} parent=1 // loop_exit
      _
    %v182 = vld [vmem:[#allocation7] sm:$0xff]
    %s183 = scalar_lea.vmem [#allocation7], 8
    %s184 = scalar_lea.vmem [#allocation7], 16
    %s185 = scalar_lea.vmem [#allocation7], 24
    %s186 = scalar_lea.vmem [#allocation7], 32
    %s187 = scalar_lea.vmem [#allocation7], 40
    %s188 = scalar_lea.vmem [#allocation7], 48
    %s189 = scalar_lea.vmem [#allocation7], 56
    %s190 = scalar_lea.vmem [#allocation7], 64
    %s191 = scalar_lea.vmem [#allocation7], 72
    %s192 = scalar_lea.vmem [#allocation7], 80
    %s193 = scalar_lea.vmem [#allocation7], 88
    %s194 = scalar_lea.vmem [#allocation7], 96
    %s195 = scalar_lea.vmem [#allocation7], 104
    %s196 = scalar_lea.vmem [#allocation7], 112
    %s197 = scalar_lea.vmem [#allocation7], 120
    %198 = vxpose.xlu0.b32.start [1/16] %v182, 128
    %199 = vxpose.xlu0.b32.cont [2/16] 0, 128
    %200 = vxpose.xlu0.b32.cont [3/16] 0, 128
    %201 = vxpose.xlu0.b32.cont [4/16] 0, 128
    %202 = vxpose.xlu0.b32.cont [5/16] 0, 128
    %203 = vxpose.xlu0.b32.cont [6/16] 0, 128
    %204 = vxpose.xlu0.b32.cont [7/16] 0, 128
    %205 = vxpose.xlu0.b32.cont [8/16] 0, 128
    %206 = vxpose.xlu0.b32.cont [9/16] 0, 128
    %207 = vxpose.xlu0.b32.cont [10/16] 0, 128
    %208 = vxpose.xlu0.b32.cont [11/16] 0, 128
    %209 = vxpose.xlu0.b32.cont [12/16] 0, 128
    %210 = vxpose.xlu0.b32.cont [13/16] 0, 128
    %211 = vxpose.xlu0.b32.cont [14/16] 0, 128
    %212 = vxpose.xlu0.b32.cont [15/16] 0, 128
    %213 = vxpose.xlu0.b32.end [16/16] 0, 128
    %v214 = vpop.trf.xlu0
    %v215 = vpop.trf.xlu0
    %v216 = vpop.trf.xlu0
    %v217 = vpop.trf.xlu0
    %v218 = vpop.trf.xlu0
    %v219 = vpop.trf.xlu0
    %v220 = vpop.trf.xlu0
    %v221 = vpop.trf.xlu0
    %v222 = vpop.trf.xlu0
    %v223 = vpop.trf.xlu0
    %v224 = vpop.trf.xlu0
    %v225 = vpop.trf.xlu0
    %v226 = vpop.trf.xlu0
    %v227 = vpop.trf.xlu0
    %v228 = vpop.trf.xlu0
    %v229 = vpop.trf.xlu0
    %230 = vst [vmem:[#allocation5] sm:$0x1] %v214
    %s232 = sshll.u32 1, 1
    %s233 = ssub.s32 %s232, 1
    %v235 = vld [vmem:[#allocation2] sm:%s233]
    %s236 = sshll.u32 1, 1
    %s237 = ssub.s32 %s236, 1
    %238 = vst [vmem:[#allocation3] sm:%s237] %v235
    %s240 = sshll.u32 1, 1
    %s241 = ssub.s32 %s240, 1
    %v243 = vld [vmem:[#allocation5] sm:%s241]
    %s244 = sshll.u32 1, 1
    %s245 = ssub.s32 %s244, 1
    %246 = vst [vmem:[#allocation6] sm:%s245] %v243
    %p248 = scmp.gt.s32.totalorder 8, 0
    // Predicated region
    $region32: #{custom-call.22} parent=1 // pred_check
      %p249 = pneg %p248
    $region33: #{custom-call.22} parent=1 // pred_check_branch
      %251 = sbr.rel (%p249) target = $region35
    $region34: #{custom-call.22} parent=1 // pred_region
      %s252 = sshra.s32 8, 3
      %p253 = scmp.gt.s32.totalorder %s252, 0
      // Predicated region
      $region36: #{custom-call.22} parent=34 // pred_check
        %p254 = pneg %p253
      $region37: #{custom-call.22} parent=34 // pred_check_branch
        %256 = sbr.rel (%p254) target = $region39
      $region38: #{custom-call.22} parent=34 // pred_region
        %s257 = ssub.s32 %s252, 1
        %s258 = smul.u32 %s257, 128
        %s259 = sshra.s32 %s258, 4
        %s260 = scalar_lea.vmem [#allocation1], %s259
        %v261 = vld [vmem:[#allocation1] sm:$0xff]
        // While loop
        $region40: #{custom-call.22} parent=38 // loop_pre_header
          _
        $region41: #{custom-call.22} parent=38 // loop_header
          %s262 = sphi [#allocation1], %s284
          %s263 = sphi %s1, %s285
          %v264 = vphi %v261, %v286
          %s265 = ssub.s32 %s260, 64
          %p266 = scmp.gt.s32.totalorder %s262, %s265
        $region42: #{custom-call.22} parent=38 // loop_header_branch
          %268 = sbr.rel (%p266) target = $region46
        $region43: #{custom-call.22} parent=38 // loop_body
          %269 = vst [vmem:[%s263] sm:$0xff] %v264
          %v270 = vld [vmem:[%s262 + $0x8] sm:$0xff]
          %271 = vst [vmem:[%s263 + $0x8] sm:$0xff] %v270
          %v272 = vld [vmem:[%s262 + $0x10] sm:$0xff]
          %273 = vst [vmem:[%s263 + $0x10] sm:$0xff] %v272
          %v274 = vld [vmem:[%s262 + $0x18] sm:$0xff]
          %275 = vst [vmem:[%s263 + $0x18] sm:$0xff] %v274
          %v276 = vld [vmem:[%s262 + $0x20] sm:$0xff]
          %277 = vst [vmem:[%s263 + $0x20] sm:$0xff] %v276
          %v278 = vld [vmem:[%s262 + $0x28] sm:$0xff]
          %279 = vst [vmem:[%s263 + $0x28] sm:$0xff] %v278
          %v280 = vld [vmem:[%s262 + $0x30] sm:$0xff]
          %281 = vst [vmem:[%s263 + $0x30] sm:$0xff] %v280
          %v282 = vld [vmem:[%s262 + $0x38] sm:$0xff]
          %283 = vst [vmem:[%s263 + $0x38] sm:$0xff] %v282
        $region44: #{custom-call.22} parent=38 // loop_footer
          %s284 = scalar_lea.vmem %s262, 64
          %s285 = scalar_lea.vmem %s263, 64
          %v286 = vld [vmem:[%s262 + $0x40] sm:$0xff]
        $region45: #{custom-call.22} parent=38 // loop_footer_branch
          %287 = sbr.rel target = $region41
        $region46: #{custom-call.22} parent=38 // loop_exit
          _
        // While loop
        $region47: #{custom-call.22} parent=38 // loop_pre_header
          _
        $region48: #{custom-call.22} parent=38 // loop_header
          %s288 = sphi %s262, %s296
          %s289 = sphi %s263, %s297
          %v290 = vphi %v264, %v290
          %p291 = scmp.gt.s32.totalorder %s288, %s260
        $region49: #{custom-call.22} parent=38 // loop_header_branch
          %293 = sbr.rel (%p291) target = $region53
        $region50: #{custom-call.22} parent=38 // loop_body
          %v294 = vld [vmem:[%s288] sm:$0xff]
          %295 = vst [vmem:[%s289] sm:$0xff] %v294
        $region51: #{custom-call.22} parent=38 // loop_footer
          %s296 = scalar_lea.vmem %s288, 8
          %s297 = scalar_lea.vmem %s289, 8
        $region52: #{custom-call.22} parent=38 // loop_footer_branch
          %298 = sbr.rel target = $region48
        $region53: #{custom-call.22} parent=38 // loop_exit
          _
      $region39: #{custom-call.22} parent=34 // pred_fallthru
        _
      %s299 = sand.u32 8, 7
      %s300 = sshll.u32 1, %s299
      %s301 = ssub.s32 %s300, 1
      %s302 = smul.u32 %s252, 128
      %s303 = sshra.s32 %s302, 4
      %s304 = scalar_lea.vmem %s1, %s303
      %s305 = smul.u32 %s252, 128
      %s306 = sshra.s32 %s305, 4
      %s307 = scalar_lea.vmem [#allocation1], %s306
      %v308 = vld [vmem:[%s307] sm:%s301]
      %309 = vst [vmem:[%s304] sm:%s301] %v308
    $region35: #{custom-call.22} parent=1 // pred_fallthru
      _
    // Predicated region
    $region54: #{custom-call.22} parent=1 // pred_check
      _
    $region55: #{custom-call.22} parent=1 // pred_check_branch
      %311 = sbr.rel (0) target = $region57
    $region56: #{custom-call.22} parent=1 // pred_region
      %s313 = ssub.s32 16, 16
      %314 = vsyncadd [#allocation4], %s313
      %s315 = sshll.u32 [#allocation3], 4
      %s316 = int_to_ptr.vmem [resolvable:$true] %s315
      %318 = dma.vmem_to_hbm [thread:$0]  %s316, 16, %s2, [#allocation4]
    $region57: #{custom-call.22} parent=1 // pred_fallthru
      _
    // Predicated region
    $region58: #{custom-call.22} parent=1 // pred_check
      _
    $region59: #{custom-call.22} parent=1 // pred_check_branch
      %320 = sbr.rel (0) target = $region61
    $region60: #{custom-call.22} parent=1 // pred_region
      %p322 = scmp.gt.s32.totalorder 1, 0
      // Predicated region
      $region62: #{custom-call.22} parent=60 // pred_check
        %p323 = pneg %p322
      $region63: #{custom-call.22} parent=60 // pred_check_branch
        %325 = sbr.rel (%p323) target = $region65
      $region64: #{custom-call.22} parent=60 // pred_region
        %s326 = sshra.s32 1, 3
        %p327 = scmp.gt.s32.totalorder %s326, 0
        // Predicated region
        $region66: #{custom-call.22} parent=64 // pred_check
          %p328 = pneg %p327
        $region67: #{custom-call.22} parent=64 // pred_check_branch
          %330 = sbr.rel (%p328) target = $region69
        $region68: #{custom-call.22} parent=64 // pred_region
          %s331 = ssub.s32 %s326, 1
          %s332 = smul.u32 %s331, 128
          %s333 = sshra.s32 %s332, 4
          %s334 = scalar_lea.vmem [#allocation6], %s333
          %v335 = vld [vmem:[#allocation6] sm:$0xff]
          // While loop
          $region70: #{custom-call.22} parent=68 // loop_pre_header
            _
          $region71: #{custom-call.22} parent=68 // loop_header
            %s336 = sphi [#allocation6], %s358
            %s337 = sphi %s3, %s359
            %v338 = vphi %v335, %v360
            %s339 = ssub.s32 %s334, 64
            %p340 = scmp.gt.s32.totalorder %s336, %s339
          $region72: #{custom-call.22} parent=68 // loop_header_branch
            %342 = sbr.rel (%p340) target = $region76
          $region73: #{custom-call.22} parent=68 // loop_body
            %343 = vst [vmem:[%s337] sm:$0xff] %v338
            %v344 = vld [vmem:[%s336 + $0x8] sm:$0xff]
            %345 = vst [vmem:[%s337 + $0x8] sm:$0xff] %v344
            %v346 = vld [vmem:[%s336 + $0x10] sm:$0xff]
            %347 = vst [vmem:[%s337 + $0x10] sm:$0xff] %v346
            %v348 = vld [vmem:[%s336 + $0x18] sm:$0xff]
            %349 = vst [vmem:[%s337 + $0x18] sm:$0xff] %v348
            %v350 = vld [vmem:[%s336 + $0x20] sm:$0xff]
            %351 = vst [vmem:[%s337 + $0x20] sm:$0xff] %v350
            %v352 = vld [vmem:[%s336 + $0x28] sm:$0xff]
            %353 = vst [vmem:[%s337 + $0x28] sm:$0xff] %v352
            %v354 = vld [vmem:[%s336 + $0x30] sm:$0xff]
            %355 = vst [vmem:[%s337 + $0x30] sm:$0xff] %v354
            %v356 = vld [vmem:[%s336 + $0x38] sm:$0xff]
            %357 = vst [vmem:[%s337 + $0x38] sm:$0xff] %v356
          $region74: #{custom-call.22} parent=68 // loop_footer
            %s358 = scalar_lea.vmem %s336, 64
            %s359 = scalar_lea.vmem %s337, 64
            %v360 = vld [vmem:[%s336 + $0x40] sm:$0xff]
          $region75: #{custom-call.22} parent=68 // loop_footer_branch
            %361 = sbr.rel target = $region71
          $region76: #{custom-call.22} parent=68 // loop_exit
            _
          // While loop
          $region77: #{custom-call.22} parent=68 // loop_pre_header
            _
          $region78: #{custom-call.22} parent=68 // loop_header
            %s362 = sphi %s336, %s370
            %s363 = sphi %s337, %s371
            %v364 = vphi %v338, %v364
            %p365 = scmp.gt.s32.totalorder %s362, %s334
          $region79: #{custom-call.22} parent=68 // loop_header_branch
            %367 = sbr.rel (%p365) target = $region83
          $region80: #{custom-call.22} parent=68 // loop_body
            %v368 = vld [vmem:[%s362] sm:$0xff]
            %369 = vst [vmem:[%s363] sm:$0xff] %v368
          $region81: #{custom-call.22} parent=68 // loop_footer
            %s370 = scalar_lea.vmem %s362, 8
            %s371 = scalar_lea.vmem %s363, 8
          $region82: #{custom-call.22} parent=68 // loop_footer_branch
            %372 = sbr.rel target = $region78
          $region83: #{custom-call.22} parent=68 // loop_exit
            _
        $region69: #{custom-call.22} parent=64 // pred_fallthru
          _
        %s373 = sand.u32 1, 7
        %s374 = sshll.u32 1, %s373
        %s375 = ssub.s32 %s374, 1
        %s376 = smul.u32 %s326, 128
        %s377 = sshra.s32 %s376, 4
        %s378 = scalar_lea.vmem %s3, %s377
        %s379 = smul.u32 %s326, 128
        %s380 = sshra.s32 %s379, 4
        %s381 = scalar_lea.vmem [#allocation6], %s380
        %v382 = vld [vmem:[%s381] sm:%s375]
        %383 = vst [vmem:[%s378] sm:%s375] %v382
      $region65: #{custom-call.22} parent=60 // pred_fallthru
        _
    $region61: #{custom-call.22} parent=1 // pred_fallthru
      _
    // Predicated region
    $region84: #{custom-call.22} parent=1 // pred_check
      _
    $region85: #{custom-call.22} parent=1 // pred_check_branch
      %385 = sbr.rel (0) target = $region87
    $region86: #{custom-call.22} parent=1 // pred_region
      %386 = dma.done [#allocation4], 16
    $region87: #{custom-call.22} parent=1 // pred_fallthru
      _
    // Predicated region
    $region88: #{custom-call.22} parent=1 // pred_check
      _
    $region89: #{custom-call.22} parent=1 // pred_check_branch
      %388 = sbr.rel (0) target = $region91
    $region90: #{custom-call.22} parent=1 // pred_region
      _
    $region91: #{custom-call.22} parent=1 // pred_fallthru
      _
    %389 = vsyncpa [#allocation4], 1

// kernel: custom-call.24
$region0: #{custom-call.24}
  %s0 = inlined_call_operand.vmem [shape: f32[1,8,8], index: 0, kind: input, shape index: {}]
  %s1 = inlined_call_operand.vmem [shape: f32[1,8,8], index: 1, kind: output, shape index: {}]
  $region1: #{custom-call.24} parent=0
    #allocation0 [shape = 'u8[4096]{0}', space=vmem, size = 0x1000, scoped, tag = 'operand span for operand 0']
    #allocation1 [shape = 'u8[4096]{0}', space=vmem, size = 0x1000, scoped, tag = 'operand span for operand 1']
    #allocation2 [shape = 'f32[8,8]{1,0}', space=vmem, size = 0x1000, scoped, tag = 'rescaled input a']
    // Predicated region
    $region2: #{custom-call.24} parent=1 // pred_check
      _
    $region3: #{custom-call.24} parent=1 // pred_check_branch
      %3 = sbr.rel (0) target = $region5
    $region4: #{custom-call.24} parent=1 // pred_region
      // Predicated region
      $region6: #{custom-call.24} parent=4 // pred_check
        _
      $region7: #{custom-call.24} parent=4 // pred_check_branch
        %5 = sbr.rel (0) target = $region9
      $region8: #{custom-call.24} parent=4 // pred_region
        // Predicated region
        $region21: #{custom-call.24} parent=8 // pred_check
          _
        $region22: #{custom-call.24} parent=8 // pred_check_branch
          %21 = sbr.rel (0) target = $region24
        $region23: #{custom-call.24} parent=8 // pred_region
          loop: start=0, step=1, limit=1
          $region25: #{custom-call.24} parent=23 // loop_pre_header
            _
          $region26: #{custom-call.24} parent=23 // loop_header
            %s23 = sphi 0, %s27
            %p24 = scmp.ge.s32.totalorder %s23, 1
            %s28 = sphi %s0, %s0
            %s29 = sphi [#allocation0], [#allocation0]
          $region27: #{custom-call.24} parent=23 // loop_header_branch
            %26 = sbr.rel (%p24) target = $region31
          $region28: #{custom-call.24} parent=23 // loop_body
            %v30 = vld [vmem:[%s28] sm:$0xff]
            %31 = vst [vmem:[%s29] sm:$0xff] %v30
          $region29: #{custom-call.24} parent=23 // loop_footer
            %s27 = sadd.s32 1, %s23
          $region30: #{custom-call.24} parent=23 // loop_footer_branch
            %22 = sbr.rel target = $region26
          $region31: #{custom-call.24} parent=23 // loop_exit
            _
        $region24: #{custom-call.24} parent=8 // pred_fallthru
          _
        // Predicated region
        $region32: #{custom-call.24} parent=8 // pred_check
          _
        $region33: #{custom-call.24} parent=8 // pred_check_branch
          %33 = sbr.rel target = $region35
        $region34: #{custom-call.24} parent=8 // pred_region
          _
        $region35: #{custom-call.24} parent=8 // pred_fallthru
          _
      $region9: #{custom-call.24} parent=4 // pred_fallthru
        _
      // Predicated region
      $region10: #{custom-call.24} parent=4 // pred_check
        _
      $region11: #{custom-call.24} parent=4 // pred_check_branch
        %7 = sbr.rel target = $region13
      $region12: #{custom-call.24} parent=4 // pred_region
        %s9 = ssub.s32 256, 1
        loop: start=0, step=1, limit=1
        $region14: #{custom-call.24} parent=12 // loop_pre_header
          _
        $region15: #{custom-call.24} parent=12 // loop_header
          %s11 = sphi 0, %s15
          %p12 = scmp.ge.s32.totalorder %s11, 1
          %s16 = sphi %s0, %s0
          %s17 = sphi [#allocation0], [#allocation0]
        $region16: #{custom-call.24} parent=12 // loop_header_branch
          %14 = sbr.rel (%p12) target = $region20
        $region17: #{custom-call.24} parent=12 // loop_body
          %v18 = vld [vmem:[%s16] sm:%s9]
          %19 = vst [vmem:[%s17] sm:%s9] %v18
        $region18: #{custom-call.24} parent=12 // loop_footer
          %s15 = sadd.s32 1, %s11
        $region19: #{custom-call.24} parent=12 // loop_footer_branch
          %10 = sbr.rel target = $region15
        $region20: #{custom-call.24} parent=12 // loop_exit
          _
      $region13: #{custom-call.24} parent=4 // pred_fallthru
        _
    $region5: #{custom-call.24} parent=1 // pred_fallthru
      _
    %34 = vnop
    %v35 = vlaneseq
    %v36 = vand.u32 %v35, 127
    %vm37 = vcmp.lt.s32.totalorder %v36, 8
    %v38 = vlaneseq
    %v39 = vshrl.u32 %v38, 7
    %vm41 = vcmp.eq.s32.totalorder %v39, %v36
    %v42 = vld [vmem:[#allocation0] sm:$0xff]
    %v43 = vsel %vm41, %v42, 0.0
    %44 = vadd.xlane.f32.xlu0 %v43
    %v45 = vpop.xlane.xlu0 %44
    %vm46 = vcmp.ge.s32.totalorder %v39, %v36
    %vm47 = vmand %vm46, %vm37
    %v48 = vsel %vm47, %v42, 0.0
    %v49 = vrcp.pop %v45
    %v50 = vmul.f32 %v48, %v49
    %51 = vst [vmem:[#allocation2] sm:$0xff] %v50
    %v52 = vlaneseq
    %v53 = vand.u32 %v52, 127
    %v54 = vlaneseq
    %v55 = vshrl.u32 %v54, 7
    %vm57 = vcmp.eq.s32.totalorder %v53, %v55
    %v58 = vlaneseq
    %v59 = vand.u32 %v58, 127
    %vm60 = vcmp.eq.s32.totalorder %v59, 0
    %v61 = vsel %vm60, 1.0, -1.0
    %v62 = vsel %vm57, %v61, 0.0
    %s63 = scalar_lea.vmem [#allocation2], 1
    %v64 = vld [vmem:[%s63] ss:$0 sm:$0xff]
    %v65 = vxor.u32 %v64, 2147483648
    %v66 = vlaneseq
    %v67 = vand.u32 %v66, 127
    %vm68 = vcmp.eq.s32.totalorder %v67, 1
    %v69 = vmul.f32 %v65, %v62
    %70 = vadd.xlane.f32.xlu0 %v69
    %v71 = vpop.xlane.xlu0 %70
    %v72 = vsel %vm68, %v71, %v62
    %s73 = scalar_lea.vmem [#allocation2], 2
    %v74 = vld [vmem:[%s73] ss:$0 sm:$0xff]
    %v75 = vxor.u32 %v74, 2147483648
    %v76 = vlaneseq
    %v77 = vand.u32 %v76, 127
    %vm78 = vcmp.eq.s32.totalorder %v77, 2
    %v79 = vmul.f32 %v75, %v72
    %80 = vadd.xlane.f32.xlu0 %v79
    %v81 = vpop.xlane.xlu0 %80
    %v82 = vsel %vm78, %v81, %v72
    %s83 = scalar_lea.vmem [#allocation2], 3
    %v84 = vld [vmem:[%s83] ss:$0 sm:$0xff]
    %v85 = vxor.u32 %v84, 2147483648
    %v86 = vlaneseq
    %v87 = vand.u32 %v86, 127
    %vm88 = vcmp.eq.s32.totalorder %v87, 3
    %v89 = vmul.f32 %v85, %v82
    %90 = vadd.xlane.f32.xlu0 %v89
    %v91 = vpop.xlane.xlu0 %90
    %v92 = vsel %vm88, %v91, %v82
    %s93 = scalar_lea.vmem [#allocation2], 4
    %v94 = vld [vmem:[%s93] ss:$0 sm:$0xff]
    %v95 = vxor.u32 %v94, 2147483648
    %v96 = vlaneseq
    %v97 = vand.u32 %v96, 127
    %vm98 = vcmp.eq.s32.totalorder %v97, 4
    %v99 = vmul.f32 %v95, %v92
    %100 = vadd.xlane.f32.xlu0 %v99
    %v101 = vpop.xlane.xlu0 %100
    %v102 = vsel %vm98, %v101, %v92
    %s103 = scalar_lea.vmem [#allocation2], 5
    %v104 = vld [vmem:[%s103] ss:$0 sm:$0xff]
    %v105 = vxor.u32 %v104, 2147483648
    %v106 = vlaneseq
    %v107 = vand.u32 %v106, 127
    %vm108 = vcmp.eq.s32.totalorder %v107, 5
    %v109 = vmul.f32 %v105, %v102
    %110 = vadd.xlane.f32.xlu0 %v109
    %v111 = vpop.xlane.xlu0 %110
    %v112 = vsel %vm108, %v111, %v102
    %s113 = scalar_lea.vmem [#allocation2], 6
    %v114 = vld [vmem:[%s113] ss:$0 sm:$0xff]
    %v115 = vxor.u32 %v114, 2147483648
    %v116 = vlaneseq
    %v117 = vand.u32 %v116, 127
    %vm118 = vcmp.eq.s32.totalorder %v117, 6
    %v119 = vmul.f32 %v115, %v112
    %120 = vadd.xlane.f32.xlu0 %v119
    %v121 = vpop.xlane.xlu0 %120
    %v122 = vsel %vm118, %v121, %v112
    %s123 = scalar_lea.vmem [#allocation2], 7
    %v124 = vld [vmem:[%s123] ss:$0 sm:$0xff]
    %v125 = vxor.u32 %v124, 2147483648
    %v126 = vlaneseq
    %v127 = vand.u32 %v126, 127
    %vm128 = vcmp.eq.s32.totalorder %v127, 7
    %v129 = vmul.f32 %v125, %v122
    %130 = vadd.xlane.f32.xlu0 %v129
    %v131 = vpop.xlane.xlu0 %130
    %v132 = vsel %vm128, %v131, %v122
    %v133 = vrcp.pop %v45
    %v134 = vmul.f32 %v132, %v133
    %vm135 = vweird.f32 %v45
    %v136 = vsel %vm135, %v132, %v134
    %137 = vst [vmem:[#allocation1] sm:$0xff] %v136
    // Predicated region
    $region36: #{custom-call.24} parent=1 // pred_check
      _
    $region37: #{custom-call.24} parent=1 // pred_check_branch
      %139 = sbr.rel (0) target = $region39
    $region38: #{custom-call.24} parent=1 // pred_region
      // Predicated region
      $region40: #{custom-call.24} parent=38 // pred_check
        _
      $region41: #{custom-call.24} parent=38 // pred_check_branch
        %141 = sbr.rel (0) target = $region43
      $region42: #{custom-call.24} parent=38 // pred_region
        // Predicated region
        $region55: #{custom-call.24} parent=42 // pred_check
          _
        $region56: #{custom-call.24} parent=42 // pred_check_branch
          %157 = sbr.rel (0) target = $region58
        $region57: #{custom-call.24} parent=42 // pred_region
          loop: start=0, step=1, limit=1
          $region59: #{custom-call.24} parent=57 // loop_pre_header
            _
          $region60: #{custom-call.24} parent=57 // loop_header
            %s159 = sphi 0, %s163
            %p160 = scmp.ge.s32.totalorder %s159, 1
            %s164 = sphi [#allocation1], [#allocation1]
            %s165 = sphi %s1, %s1
          $region61: #{custom-call.24} parent=57 // loop_header_branch
            %162 = sbr.rel (%p160) target = $region65
          $region62: #{custom-call.24} parent=57 // loop_body
            %v166 = vld [vmem:[%s164] sm:$0xff]
            %167 = vst [vmem:[%s165] sm:$0xff] %v166
          $region63: #{custom-call.24} parent=57 // loop_footer
            %s163 = sadd.s32 1, %s159
          $region64: #{custom-call.24} parent=57 // loop_footer_branch
            %158 = sbr.rel target = $region60
          $region65: #{custom-call.24} parent=57 // loop_exit
            _
        $region58: #{custom-call.24} parent=42 // pred_fallthru
          _
        // Predicated region
        $region66: #{custom-call.24} parent=42 // pred_check
          _
        $region67: #{custom-call.24} parent=42 // pred_check_branch
          %169 = sbr.rel target = $region69
        $region68: #{custom-call.24} parent=42 // pred_region
          _
        $region69: #{custom-call.24} parent=42 // pred_fallthru
          _
      $region43: #{custom-call.24} parent=38 // pred_fallthru
        _
      // Predicated region
      $region44: #{custom-call.24} parent=38 // pred_check
        _
      $region45: #{custom-call.24} parent=38 // pred_check_branch
        %143 = sbr.rel target = $region47
      $region46: #{custom-call.24} parent=38 // pred_region
        %s145 = ssub.s32 256, 1
        loop: start=0, step=1, limit=1
        $region48: #{custom-call.24} parent=46 // loop_pre_header
          _
        $region49: #{custom-call.24} parent=46 // loop_header
          %s147 = sphi 0, %s151
          %p148 = scmp.ge.s32.totalorder %s147, 1
          %s152 = sphi [#allocation1], [#allocation1]
          %s153 = sphi %s1, %s1
        $region50: #{custom-call.24} parent=46 // loop_header_branch
          %150 = sbr.rel (%p148) target = $region54
        $region51: #{custom-call.24} parent=46 // loop_body
          %v154 = vld [vmem:[%s152] sm:%s145]
          %155 = vst [vmem:[%s153] sm:%s145] %v154
        $region52: #{custom-call.24} parent=46 // loop_footer
          %s151 = sadd.s32 1, %s147
        $region53: #{custom-call.24} parent=46 // loop_footer_branch
          %146 = sbr.rel target = $region49
        $region54: #{custom-call.24} parent=46 // loop_exit
          _
      $region47: #{custom-call.24} parent=38 // pred_fallthru
        _
    $region39: #{custom-call.24} parent=1 // pred_fallthru
      _
    %170 = vnop

// kernel: custom-call.23
$region0: #{custom-call.23}
  %s0 = inlined_call_operand.vmem [shape: f32[1,8,8], index: 0, kind: input, shape index: {}]
  %s1 = inlined_call_operand.vmem [shape: f32[1,8,8], index: 1, kind: output, shape index: {}]
  $region1: #{custom-call.23} parent=0
    #allocation0 [shape = 'u8[4096]{0}', space=vmem, size = 0x1000, scoped, tag = 'operand span for operand 0']
    #allocation1 [shape = 'u8[4096]{0}', space=vmem, size = 0x1000, scoped, tag = 'operand span for operand 1']
    #allocation2 [shape = 'f32[8,8]{1,0}', space=vmem, size = 0x1000, scoped, tag = 'rescaled input a']
    // Predicated region
    $region2: #{custom-call.23} parent=1 // pred_check
      _
    $region3: #{custom-call.23} parent=1 // pred_check_branch
      %3 = sbr.rel (0) target = $region5
    $region4: #{custom-call.23} parent=1 // pred_region
      // Predicated region
      $region6: #{custom-call.23} parent=4 // pred_check
        _
      $region7: #{custom-call.23} parent=4 // pred_check_branch
        %5 = sbr.rel (0) target = $region9
      $region8: #{custom-call.23} parent=4 // pred_region
        // Predicated region
        $region21: #{custom-call.23} parent=8 // pred_check
          _
        $region22: #{custom-call.23} parent=8 // pred_check_branch
          %21 = sbr.rel (0) target = $region24
        $region23: #{custom-call.23} parent=8 // pred_region
          loop: start=0, step=1, limit=1
          $region25: #{custom-call.23} parent=23 // loop_pre_header
            _
          $region26: #{custom-call.23} parent=23 // loop_header
            %s23 = sphi 0, %s27
            %p24 = scmp.ge.s32.totalorder %s23, 1
            %s28 = sphi %s0, %s0
            %s29 = sphi [#allocation0], [#allocation0]
          $region27: #{custom-call.23} parent=23 // loop_header_branch
            %26 = sbr.rel (%p24) target = $region31
          $region28: #{custom-call.23} parent=23 // loop_body
            %v30 = vld [vmem:[%s28] sm:$0xff]
            %31 = vst [vmem:[%s29] sm:$0xff] %v30
          $region29: #{custom-call.23} parent=23 // loop_footer
            %s27 = sadd.s32 1, %s23
          $region30: #{custom-call.23} parent=23 // loop_footer_branch
            %22 = sbr.rel target = $region26
          $region31: #{custom-call.23} parent=23 // loop_exit
            _
        $region24: #{custom-call.23} parent=8 // pred_fallthru
          _
        // Predicated region
        $region32: #{custom-call.23} parent=8 // pred_check
          _
        $region33: #{custom-call.23} parent=8 // pred_check_branch
          %33 = sbr.rel target = $region35
        $region34: #{custom-call.23} parent=8 // pred_region
          _
        $region35: #{custom-call.23} parent=8 // pred_fallthru
          _
      $region9: #{custom-call.23} parent=4 // pred_fallthru
        _
      // Predicated region
      $region10: #{custom-call.23} parent=4 // pred_check
        _
      $region11: #{custom-call.23} parent=4 // pred_check_branch
        %7 = sbr.rel target = $region13
      $region12: #{custom-call.23} parent=4 // pred_region
        %s9 = ssub.s32 256, 1
        loop: start=0, step=1, limit=1
        $region14: #{custom-call.23} parent=12 // loop_pre_header
          _
        $region15: #{custom-call.23} parent=12 // loop_header
          %s11 = sphi 0, %s15
          %p12 = scmp.ge.s32.totalorder %s11, 1
          %s16 = sphi %s0, %s0
          %s17 = sphi [#allocation0], [#allocation0]
        $region16: #{custom-call.23} parent=12 // loop_header_branch
          %14 = sbr.rel (%p12) target = $region20
        $region17: #{custom-call.23} parent=12 // loop_body
          %v18 = vld [vmem:[%s16] sm:%s9]
          %19 = vst [vmem:[%s17] sm:%s9] %v18
        $region18: #{custom-call.23} parent=12 // loop_footer
          %s15 = sadd.s32 1, %s11
        $region19: #{custom-call.23} parent=12 // loop_footer_branch
          %10 = sbr.rel target = $region15
        $region20: #{custom-call.23} parent=12 // loop_exit
          _
      $region13: #{custom-call.23} parent=4 // pred_fallthru
        _
    $region5: #{custom-call.23} parent=1 // pred_fallthru
      _
    %34 = vnop
    %v35 = vlaneseq
    %v36 = vand.u32 %v35, 127
    %vm37 = vcmp.lt.s32.totalorder %v36, 8
    %v38 = vlaneseq
    %v39 = vshrl.u32 %v38, 7
    %vm41 = vcmp.eq.s32.totalorder %v39, %v36
    %v42 = vld [vmem:[#allocation0] sm:$0xff]
    %v43 = vsel %vm41, %v42, 0.0
    %44 = vadd.xlane.f32.xlu0 %v43
    %v45 = vpop.xlane.xlu0 %44
    %vm46 = vcmp.le.s32.totalorder %v39, %v36
    %vm47 = vmand %vm46, %vm37
    %v48 = vsel %vm47, %v42, 0.0
    %v49 = vrcp.pop %v45
    %v50 = vmul.f32 %v48, %v49
    %51 = vst [vmem:[#allocation2] sm:$0xff] %v50
    %v52 = vlaneseq
    %v53 = vand.u32 %v52, 127
    %v54 = vlaneseq
    %v55 = vshrl.u32 %v54, 7
    %vm57 = vcmp.eq.s32.totalorder %v53, %v55
    %v58 = vlaneseq
    %v59 = vand.u32 %v58, 127
    %vm60 = vcmp.eq.s32.totalorder %v59, 7
    %v61 = vsel %vm60, 1.0, -1.0
    %v62 = vsel %vm57, %v61, 0.0
    %s63 = scalar_lea.vmem [#allocation2], 6
    %v64 = vld [vmem:[%s63] ss:$0 sm:$0xff]
    %v65 = vxor.u32 %v64, 2147483648
    %v66 = vlaneseq
    %v67 = vand.u32 %v66, 127
    %vm68 = vcmp.eq.s32.totalorder %v67, 6
    %v69 = vmul.f32 %v65, %v62
    %70 = vadd.xlane.f32.xlu0 %v69
    %v71 = vpop.xlane.xlu0 %70
    %v72 = vsel %vm68, %v71, %v62
    %s73 = scalar_lea.vmem [#allocation2], 5
    %v74 = vld [vmem:[%s73] ss:$0 sm:$0xff]
    %v75 = vxor.u32 %v74, 2147483648
    %v76 = vlaneseq
    %v77 = vand.u32 %v76, 127
    %vm78 = vcmp.eq.s32.totalorder %v77, 5
    %v79 = vmul.f32 %v75, %v72
    %80 = vadd.xlane.f32.xlu0 %v79
    %v81 = vpop.xlane.xlu0 %80
    %v82 = vsel %vm78, %v81, %v72
    %s83 = scalar_lea.vmem [#allocation2], 4
    %v84 = vld [vmem:[%s83] ss:$0 sm:$0xff]
    %v85 = vxor.u32 %v84, 2147483648
    %v86 = vlaneseq
    %v87 = vand.u32 %v86, 127
    %vm88 = vcmp.eq.s32.totalorder %v87, 4
    %v89 = vmul.f32 %v85, %v82
    %90 = vadd.xlane.f32.xlu0 %v89
    %v91 = vpop.xlane.xlu0 %90
    %v92 = vsel %vm88, %v91, %v82
    %s93 = scalar_lea.vmem [#allocation2], 3
    %v94 = vld [vmem:[%s93] ss:$0 sm:$0xff]
    %v95 = vxor.u32 %v94, 2147483648
    %v96 = vlaneseq
    %v97 = vand.u32 %v96, 127
    %vm98 = vcmp.eq.s32.totalorder %v97, 3
    %v99 = vmul.f32 %v95, %v92
    %100 = vadd.xlane.f32.xlu0 %v99
    %v101 = vpop.xlane.xlu0 %100
    %v102 = vsel %vm98, %v101, %v92
    %s103 = scalar_lea.vmem [#allocation2], 2
    %v104 = vld [vmem:[%s103] ss:$0 sm:$0xff]
    %v105 = vxor.u32 %v104, 2147483648
    %v106 = vlaneseq
    %v107 = vand.u32 %v106, 127
    %vm108 = vcmp.eq.s32.totalorder %v107, 2
    %v109 = vmul.f32 %v105, %v102
    %110 = vadd.xlane.f32.xlu0 %v109
    %v111 = vpop.xlane.xlu0 %110
    %v112 = vsel %vm108, %v111, %v102
    %s113 = scalar_lea.vmem [#allocation2], 1
    %v114 = vld [vmem:[%s113] ss:$0 sm:$0xff]
    %v115 = vxor.u32 %v114, 2147483648
    %v116 = vlaneseq
    %v117 = vand.u32 %v116, 127
    %vm118 = vcmp.eq.s32.totalorder %v117, 1
    %v119 = vmul.f32 %v115, %v112
    %120 = vadd.xlane.f32.xlu0 %v119
    %v121 = vpop.xlane.xlu0 %120
    %v122 = vsel %vm118, %v121, %v112
    %v123 = vld [vmem:[#allocation2] ss:$0 sm:$0xff]
    %v124 = vxor.u32 %v123, 2147483648
    %v125 = vlaneseq
    %v126 = vand.u32 %v125, 127
    %vm127 = vcmp.eq.s32.totalorder %v126, 0
    %v128 = vmul.f32 %v124, %v122
    %129 = vadd.xlane.f32.xlu0 %v128
    %v130 = vpop.xlane.xlu0 %129
    %v131 = vsel %vm127, %v130, %v122
    %v132 = vrcp.pop %v45
    %v133 = vmul.f32 %v131, %v132
    %vm134 = vweird.f32 %v45
    %v135 = vsel %vm134, %v131, %v133
    %136 = vst [vmem:[#allocation1] sm:$0xff] %v135
    // Predicated region
    $region36: #{custom-call.23} parent=1 // pred_check
      _
    $region37: #{custom-call.23} parent=1 // pred_check_branch
      %138 = sbr.rel (0) target = $region39
    $region38: #{custom-call.23} parent=1 // pred_region
      // Predicated region
      $region40: #{custom-call.23} parent=38 // pred_check
        _
      $region41: #{custom-call.23} parent=38 // pred_check_branch
        %140 = sbr.rel (0) target = $region43
      $region42: #{custom-call.23} parent=38 // pred_region
        // Predicated region
        $region55: #{custom-call.23} parent=42 // pred_check
          _
        $region56: #{custom-call.23} parent=42 // pred_check_branch
          %156 = sbr.rel (0) target = $region58
        $region57: #{custom-call.23} parent=42 // pred_region
          loop: start=0, step=1, limit=1
          $region59: #{custom-call.23} parent=57 // loop_pre_header
            _
          $region60: #{custom-call.23} parent=57 // loop_header
            %s158 = sphi 0, %s162
            %p159 = scmp.ge.s32.totalorder %s158, 1
            %s163 = sphi [#allocation1], [#allocation1]
            %s164 = sphi %s1, %s1
          $region61: #{custom-call.23} parent=57 // loop_header_branch
            %161 = sbr.rel (%p159) target = $region65
          $region62: #{custom-call.23} parent=57 // loop_body
            %v165 = vld [vmem:[%s163] sm:$0xff]
            %166 = vst [vmem:[%s164] sm:$0xff] %v165
          $region63: #{custom-call.23} parent=57 // loop_footer
            %s162 = sadd.s32 1, %s158
          $region64: #{custom-call.23} parent=57 // loop_footer_branch
            %157 = sbr.rel target = $region60
          $region65: #{custom-call.23} parent=57 // loop_exit
            _
        $region58: #{custom-call.23} parent=42 // pred_fallthru
          _
        // Predicated region
        $region66: #{custom-call.23} parent=42 // pred_check
          _
        $region67: #{custom-call.23} parent=42 // pred_check_branch
          %168 = sbr.rel target = $region69
        $region68: #{custom-call.23} parent=42 // pred_region
          _
        $region69: #{custom-call.23} parent=42 // pred_fallthru
          _
      $region43: #{custom-call.23} parent=38 // pred_fallthru
        _
      // Predicated region
      $region44: #{custom-call.23} parent=38 // pred_check
        _
      $region45: #{custom-call.23} parent=38 // pred_check_branch
        %142 = sbr.rel target = $region47
      $region46: #{custom-call.23} parent=38 // pred_region
        %s144 = ssub.s32 256, 1
        loop: start=0, step=1, limit=1
        $region48: #{custom-call.23} parent=46 // loop_pre_header
          _
        $region49: #{custom-call.23} parent=46 // loop_header
          %s146 = sphi 0, %s150
          %p147 = scmp.ge.s32.totalorder %s146, 1
          %s151 = sphi [#allocation1], [#allocation1]
          %s152 = sphi %s1, %s1
        $region50: #{custom-call.23} parent=46 // loop_header_branch
          %149 = sbr.rel (%p147) target = $region54
        $region51: #{custom-call.23} parent=46 // loop_body
          %v153 = vld [vmem:[%s151] sm:%s144]
          %154 = vst [vmem:[%s152] sm:%s144] %v153
        $region52: #{custom-call.23} parent=46 // loop_footer
          %s150 = sadd.s32 1, %s146
        $region53: #{custom-call.23} parent=46 // loop_footer_branch
          %145 = sbr.rel target = $region49
        $region54: #{custom-call.23} parent=46 // loop_exit
          _
      $region47: #{custom-call.23} parent=38 // pred_fallthru
        _
    $region39: #{custom-call.23} parent=1 // pred_fallthru
      _
    %169 = vnop

// kernel: _precompute.1
$region0: #{_precompute.1}
  #allocation0 [shape = 'u32[]', space=smem, size = 0x4, offset = 0x4, fixed_abs, tag = 'smem constant byte address 0x4 - core index']
  #allocation1 [shape = 'u32[144,128]{1,0:T(1,128)}', space=vmem, size = 0x12000, scoped, tag = 'internal scratch']
  %s0 = inlined_call_operand.vmem [shape: f32[24,24], index: 0, kind: input, shape index: {}]
  %s1 = inlined_call_operand.vmem [shape: f32[24,24], index: 1, kind: input, shape index: {}]
  %s2 = inlined_call_operand.vmem [shape: f32[24,4], index: 2, kind: input, shape index: {}]
  %s3 = inlined_call_operand.vmem [shape: f32[4,4], index: 3, kind: input, shape index: {}]
  %s4 = inlined_call_operand.vmem [shape: f32[4,24], index: 4, kind: input, shape index: {}]
  %s5 = inlined_call_operand.vmem [shape: f32[24,6], index: 5, kind: input, shape index: {}]
  %s6 = inlined_call_operand.vmem [shape: f32[6,24], index: 6, kind: input, shape index: {}]
  %s7 = inlined_call_operand.vmem [shape: f32[24,24], index: 7, kind: output, shape index: {}]
  %s8 = sld [smem:[#allocation0]]
  $region38: #{_precompute.1} parent=0
    _
  %s10 = ssub.s32 1, %s8
  %s11 = scalar_select 0, %s10, %s8
  // Predicated region
  $region2: #{_precompute.1} parent=0 // pred_check
    _
  $region3: #{_precompute.1} parent=0 // pred_check_branch
    %13 = sbr.rel (0) target = $region5
  $region4: #{_precompute.1} parent=0 // pred_region
    _
  $region5: #{_precompute.1} parent=0 // pred_fallthru
    _
  // Predicated region
  $region6: #{_precompute.1} parent=0 // pred_check
    _
  $region7: #{_precompute.1} parent=0 // pred_check_branch
    %15 = sbr.rel (0) target = $region9
  $region8: #{_precompute.1} parent=0 // pred_region
    _
  $region9: #{_precompute.1} parent=0 // pred_fallthru
    _
  // Predicated region
  $region10: #{_precompute.1} parent=0 // pred_check
    _
  $region11: #{_precompute.1} parent=0 // pred_check_branch
    %17 = sbr.rel (0) target = $region13
  $region12: #{_precompute.1} parent=0 // pred_region
    _
  $region13: #{_precompute.1} parent=0 // pred_fallthru
    _
  // Predicated region
  $region14: #{_precompute.1} parent=0 // pred_check
    _
  $region15: #{_precompute.1} parent=0 // pred_check_branch
    %19 = sbr.rel (0) target = $region17
  $region16: #{_precompute.1} parent=0 // pred_region
    _
  $region17: #{_precompute.1} parent=0 // pred_fallthru
    _
  // Predicated region
  $region18: #{_precompute.1} parent=0 // pred_check
    _
  $region19: #{_precompute.1} parent=0 // pred_check_branch
    %21 = sbr.rel (0) target = $region21
  $region20: #{_precompute.1} parent=0 // pred_region
    _
  $region21: #{_precompute.1} parent=0 // pred_fallthru
    _
  // Predicated region
  $region22: #{_precompute.1} parent=0 // pred_check
    _
  $region23: #{_precompute.1} parent=0 // pred_check_branch
    %23 = sbr.rel (0) target = $region25
  $region24: #{_precompute.1} parent=0 // pred_region
    _
  $region25: #{_precompute.1} parent=0 // pred_fallthru
    _
  // Predicated region
  $region26: #{_precompute.1} parent=0 // pred_check
    _
  $region27: #{_precompute.1} parent=0 // pred_check_branch
    %25 = sbr.rel (0) target = $region29
  $region28: #{_precompute.1} parent=0 // pred_region
    _
  $region29: #{_precompute.1} parent=0 // pred_fallthru
    _
  %v26 = vld [vmem:[%s0] sm:$0xff]
  %v27 = vld [vmem:[%s0 + $0x8] sm:$0xff]
  %v28 = vld [vmem:[%s0 + $0x10] sm:$0xff]
  %v29 = vld [vmem:[%s1] sm:$0xff]
  %v30 = vld [vmem:[%s1 + $0x8] sm:$0xff]
  %v31 = vld [vmem:[%s1 + $0x10] sm:$0xff]
  %v32 = vld [vmem:[%s2] sm:$0xff]
  %v33 = vld [vmem:[%s2 + $0x8] sm:$0xff]
  %v34 = vld [vmem:[%s2 + $0x10] sm:$0xff]
  %v35 = vld [vmem:[%s3] sm:$0xf]
  %vm36 = vcmask 31744
  %v38 = vsel %vm36, %v32, 0
  %v41 = vsel %vm36, %v33, 0
  %v44 = vsel %vm36, %v34, 0
  %vm46 = vcmask 1043456
  %v48 = vsel %vm46, %v35, 0
  %50 = vmatprep.subr.mxu0 0.0
  %51 = vmatpush1.msra.mxu0 0.0
  %52 = vmatprep.subr.mxu0 0.0
  %53 = vmatpush1.msra.mxu0 0.0
  %54 = vmatprep.subr.mxu0 0.0
  %55 = vmatpush1.msra.mxu0 0.0
  %56 = vmatprep.subr.mxu0 0.0
  %57 = vmatpush1.msra.mxu0 0.0
  %58 = vmatprep.subr.mxu0 0.0
  %59 = vmatpush1.msra.mxu0 0.0
  %60 = vmatprep.subr.mxu0 0.0
  %61 = vmatpush1.msra.mxu0 0.0
  %62 = vmatprep.subr.mxu0 0.0
  %63 = vmatpush1.msra.mxu0 0.0
  %64 = vmatprep.subr.mxu0 0.0
  %65 = vmatpush1.msra.mxu0 0.0
  %66 = vmatprep.subr.mxu0 0.0
  %67 = vmatpush1.msra.mxu0 0.0
  %68 = vmatprep.subr.mxu0 0.0
  %69 = vmatpush1.msra.mxu0 0.0
  %70 = vmatprep.subr.mxu0 0.0
  %71 = vmatpush1.msra.mxu0 0.0
  %72 = vmatprep.subr.mxu0 0.0
  %73 = vmatpush1.msra.mxu0 0.0
  %74 = vmatprep.subr.mxu0 0.0
  %75 = vmatpush1.msra.mxu0 0.0
  %76 = vmatprep.subr.mxu0 0.0
  %77 = vmatpush1.msra.mxu0 0.0
  %78 = vmatprep.subr.mxu0 0.0
  %79 = vmatpush1.msra.mxu0 0.0
  %80 = vmatprep.subr.mxu0 0.0
  %81 = vmatpush1.msra.mxu0 %v48
  %82 = vmatprep.subr.mxu0 0.0
  %83 = vmatpush2.msra.mxu0 0.0
  %84 = vmatprep.subr.mxu0 0.0
  %85 = vmatpush2.msra.mxu0 0.0
  %86 = vmatprep.subr.mxu0 0.0
  %87 = vmatpush2.msra.mxu0 0.0
  %88 = vmatprep.subr.mxu0 0.0
  %89 = vmatpush2.msra.mxu0 0.0
  %90 = vmatprep.subr.mxu0 0.0
  %91 = vmatpush2.msra.mxu0 0.0
  %92 = vmatprep.subr.mxu0 0.0
  %93 = vmatpush2.msra.mxu0 0.0
  %94 = vmatprep.subr.mxu0 0.0
  %95 = vmatpush2.msra.mxu0 0.0
  %96 = vmatprep.subr.mxu0 0.0
  %97 = vmatpush2.msra.mxu0 0.0
  %98 = vmatprep.subr.mxu0 0.0
  %99 = vmatpush2.msra.mxu0 0.0
  %100 = vmatprep.subr.mxu0 0.0
  %101 = vmatpush2.msra.mxu0 0.0
  %102 = vmatprep.subr.mxu0 0.0
  %103 = vmatpush2.msra.mxu0 0.0
  %104 = vmatprep.subr.mxu0 0.0
  %105 = vmatpush2.msra.mxu0 0.0
  %106 = vmatprep.subr.mxu0 0.0
  %107 = vmatpush2.msra.mxu0 0.0
  %108 = vmatprep.subr.mxu0 0.0
  %109 = vmatpush2.msra.mxu0 0.0
  %110 = vmatprep.subr.mxu0 0.0
  %111 = vmatpush2.msra.mxu0 0.0
  %112 = vmatprep.subr.mxu0 0.0
  %113 = vmatpush2.msra.mxu0 0.0
  %114 = vmatprep.mubr.f32.mxu0 0.0
  %115 = vmatmul.mubr.f32.gmra.mxu0 %v38
  %v116 = vpop.f32.mrf.mxu0
  %v117 = vadd.f32 0.0, %v116
  %v118 = vpop.f32.mrf.mxu0
  %119 = vmatprep.mubr.f32.mxu0 0.0
  %120 = vmatmul.mubr.f32.gmra.mxu0 %v41
  %v121 = vpop.f32.mrf.mxu0
  %v122 = vadd.f32 0.0, %v121
  %v123 = vpop.f32.mrf.mxu0
  %124 = vmatprep.mubr.f32.mxu0 0.0
  %125 = vmatmul.mubr.f32.gmra.mxu0 %v44
  %v126 = vpop.f32.mrf.mxu0
  %v127 = vadd.f32 0.0, %v126
  %v128 = vpop.f32.mrf.mxu0
  %129 = vdwg.mxu0
  %v130 = vld [vmem:[%s4] sm:$0xf]
  %v132 = vsel %vm36, %v117, 0
  %v135 = vsel %vm36, %v122, 0
  %v138 = vsel %vm36, %v127, 0
  %v141 = vsel %vm46, %v130, 0
  %143 = vmatprep.subr.mxu0 0.0
  %144 = vmatpush1.msra.mxu0 0.0
  %145 = vmatprep.subr.mxu0 0.0
  %146 = vmatpush1.msra.mxu0 0.0
  %147 = vmatprep.subr.mxu0 0.0
  %148 = vmatpush1.msra.mxu0 0.0
  %149 = vmatprep.subr.mxu0 0.0
  %150 = vmatpush1.msra.mxu0 0.0
  %151 = vmatprep.subr.mxu0 0.0
  %152 = vmatpush1.msra.mxu0 0.0
  %153 = vmatprep.subr.mxu0 0.0
  %154 = vmatpush1.msra.mxu0 0.0
  %155 = vmatprep.subr.mxu0 0.0
  %156 = vmatpush1.msra.mxu0 0.0
  %157 = vmatprep.subr.mxu0 0.0
  %158 = vmatpush1.msra.mxu0 0.0
  %159 = vmatprep.subr.mxu0 0.0
  %160 = vmatpush1.msra.mxu0 0.0
  %161 = vmatprep.subr.mxu0 0.0
  %162 = vmatpush1.msra.mxu0 0.0
  %163 = vmatprep.subr.mxu0 0.0
  %164 = vmatpush1.msra.mxu0 0.0
  %165 = vmatprep.subr.mxu0 0.0
  %166 = vmatpush1.msra.mxu0 0.0
  %167 = vmatprep.subr.mxu0 0.0
  %168 = vmatpush1.msra.mxu0 0.0
  %169 = vmatprep.subr.mxu0 0.0
  %170 = vmatpush1.msra.mxu0 0.0
  %171 = vmatprep.subr.mxu0 0.0
  %172 = vmatpush1.msra.mxu0 0.0
  %173 = vmatprep.subr.mxu0 0.0
  %174 = vmatpush1.msra.mxu0 %v141
  %175 = vmatprep.subr.mxu0 0.0
  %176 = vmatpush2.msra.mxu0 0.0
  %177 = vmatprep.subr.mxu0 0.0
  %178 = vmatpush2.msra.mxu0 0.0
  %179 = vmatprep.subr.mxu0 0.0
  %180 = vmatpush2.msra.mxu0 0.0
  %181 = vmatprep.subr.mxu0 0.0
  %182 = vmatpush2.msra.mxu0 0.0
  %183 = vmatprep.subr.mxu0 0.0
  %184 = vmatpush2.msra.mxu0 0.0
  %185 = vmatprep.subr.mxu0 0.0
  %186 = vmatpush2.msra.mxu0 0.0
  %187 = vmatprep.subr.mxu0 0.0
  %188 = vmatpush2.msra.mxu0 0.0
  %189 = vmatprep.subr.mxu0 0.0
  %190 = vmatpush2.msra.mxu0 0.0
  %191 = vmatprep.subr.mxu0 0.0
  %192 = vmatpush2.msra.mxu0 0.0
  %193 = vmatprep.subr.mxu0 0.0
  %194 = vmatpush2.msra.mxu0 0.0
  %195 = vmatprep.subr.mxu0 0.0
  %196 = vmatpush2.msra.mxu0 0.0
  %197 = vmatprep.subr.mxu0 0.0
  %198 = vmatpush2.msra.mxu0 0.0
  %199 = vmatprep.subr.mxu0 0.0
  %200 = vmatpush2.msra.mxu0 0.0
  %201 = vmatprep.subr.mxu0 0.0
  %202 = vmatpush2.msra.mxu0 0.0
  %203 = vmatprep.subr.mxu0 0.0
  %204 = vmatpush2.msra.mxu0 0.0
  %205 = vmatprep.subr.mxu0 0.0
  %206 = vmatpush2.msra.mxu0 0.0
  %207 = vmatprep.mubr.f32.mxu0 0.0
  %208 = vmatmul.mubr.f32.gmra.mxu0 %v132
  %v209 = vpop.f32.mrf.mxu0
  %v210 = vadd.f32 0.0, %v209
  %v211 = vpop.f32.mrf.mxu0
  %212 = vmatprep.mubr.f32.mxu0 0.0
  %213 = vmatmul.mubr.f32.gmra.mxu0 %v135
  %v214 = vpop.f32.mrf.mxu0
  %v215 = vadd.f32 0.0, %v214
  %v216 = vpop.f32.mrf.mxu0
  %217 = vmatprep.mubr.f32.mxu0 0.0
  %218 = vmatmul.mubr.f32.gmra.mxu0 %v138
  %v219 = vpop.f32.mrf.mxu0
  %v220 = vadd.f32 0.0, %v219
  %v221 = vpop.f32.mrf.mxu0
  %222 = vdwg.mxu0
  %v223 = vld [vmem:[%s5] sm:$0xff]
  %v224 = vld [vmem:[%s5 + $0x8] sm:$0xff]
  %v225 = vld [vmem:[%s5 + $0x10] sm:$0xff]
  %v226 = vld [vmem:[%s6] sm:$0x3f]
  %vm227 = vcmask 48128
  %v229 = vsel %vm227, %v223, 0
  %v232 = vsel %vm227, %v224, 0
  %v235 = vsel %vm227, %v225, 0
  %vm237 = vcmask 1045504
  %v239 = vsel %vm237, %v226, 0
  %241 = vmatprep.subr.mxu0 0.0
  %242 = vmatpush1.msra.mxu0 0.0
  %243 = vmatprep.subr.mxu0 0.0
  %244 = vmatpush1.msra.mxu0 0.0
  %245 = vmatprep.subr.mxu0 0.0
  %246 = vmatpush1.msra.mxu0 0.0
  %247 = vmatprep.subr.mxu0 0.0
  %248 = vmatpush1.msra.mxu0 0.0
  %249 = vmatprep.subr.mxu0 0.0
  %250 = vmatpush1.msra.mxu0 0.0
  %251 = vmatprep.subr.mxu0 0.0
  %252 = vmatpush1.msra.mxu0 0.0
  %253 = vmatprep.subr.mxu0 0.0
  %254 = vmatpush1.msra.mxu0 0.0
  %255 = vmatprep.subr.mxu0 0.0
  %256 = vmatpush1.msra.mxu0 0.0
  %257 = vmatprep.subr.mxu0 0.0
  %258 = vmatpush1.msra.mxu0 0.0
  %259 = vmatprep.subr.mxu0 0.0
  %260 = vmatpush1.msra.mxu0 0.0
  %261 = vmatprep.subr.mxu0 0.0
  %262 = vmatpush1.msra.mxu0 0.0
  %263 = vmatprep.subr.mxu0 0.0
  %264 = vmatpush1.msra.mxu0 0.0
  %265 = vmatprep.subr.mxu0 0.0
  %266 = vmatpush1.msra.mxu0 0.0
  %267 = vmatprep.subr.mxu0 0.0
  %268 = vmatpush1.msra.mxu0 0.0
  %269 = vmatprep.subr.mxu0 0.0
  %270 = vmatpush1.msra.mxu0 0.0
  %271 = vmatprep.subr.mxu0 0.0
  %272 = vmatpush1.msra.mxu0 %v239
  %273 = vmatprep.subr.mxu0 0.0
  %274 = vmatpush2.msra.mxu0 0.0
  %275 = vmatprep.subr.mxu0 0.0
  %276 = vmatpush2.msra.mxu0 0.0
  %277 = vmatprep.subr.mxu0 0.0
  %278 = vmatpush2.msra.mxu0 0.0
  %279 = vmatprep.subr.mxu0 0.0
  %280 = vmatpush2.msra.mxu0 0.0
  %281 = vmatprep.subr.mxu0 0.0
  %282 = vmatpush2.msra.mxu0 0.0
  %283 = vmatprep.subr.mxu0 0.0
  %284 = vmatpush2.msra.mxu0 0.0
  %285 = vmatprep.subr.mxu0 0.0
  %286 = vmatpush2.msra.mxu0 0.0
  %287 = vmatprep.subr.mxu0 0.0
  %288 = vmatpush2.msra.mxu0 0.0
  %289 = vmatprep.subr.mxu0 0.0
  %290 = vmatpush2.msra.mxu0 0.0
  %291 = vmatprep.subr.mxu0 0.0
  %292 = vmatpush2.msra.mxu0 0.0
  %293 = vmatprep.subr.mxu0 0.0
  %294 = vmatpush2.msra.mxu0 0.0
  %295 = vmatprep.subr.mxu0 0.0
  %296 = vmatpush2.msra.mxu0 0.0
  %297 = vmatprep.subr.mxu0 0.0
  %298 = vmatpush2.msra.mxu0 0.0
  %299 = vmatprep.subr.mxu0 0.0
  %300 = vmatpush2.msra.mxu0 0.0
  %301 = vmatprep.subr.mxu0 0.0
  %302 = vmatpush2.msra.mxu0 0.0
  %303 = vmatprep.subr.mxu0 0.0
  %304 = vmatpush2.msra.mxu0 0.0
  %305 = vmatprep.mubr.f32.mxu0 0.0
  %306 = vmatmul.mubr.f32.gmra.mxu0 %v229
  %v307 = vpop.f32.mrf.mxu0
  %v308 = vadd.f32 0.0, %v307
  %v309 = vpop.f32.mrf.mxu0
  %310 = vmatprep.mubr.f32.mxu0 0.0
  %311 = vmatmul.mubr.f32.gmra.mxu0 %v232
  %v312 = vpop.f32.mrf.mxu0
  %v313 = vadd.f32 0.0, %v312
  %v314 = vpop.f32.mrf.mxu0
  %315 = vmatprep.mubr.f32.mxu0 0.0
  %316 = vmatmul.mubr.f32.gmra.mxu0 %v235
  %v317 = vpop.f32.mrf.mxu0
  %v318 = vadd.f32 0.0, %v317
  %v319 = vpop.f32.mrf.mxu0
  %320 = vdwg.mxu0
  %v321 = vlaneseq
  %v322 = vshrl.u32 %v321, 7
  %v323 = vadd.s32 %v322, 8
  %v324 = vadd.s32 %v322, 16
  %v325 = vlaneseq
  %v326 = vand.u32 %v325, 127
  %vm327 = vcmp.eq.s32.totalorder %v322, %v326
  %vm328 = vcmp.eq.s32.totalorder %v323, %v326
  %vm329 = vcmp.eq.s32.totalorder %v324, %v326
  %v330 = vsel %vm327, 0.001, 0.0
  %v331 = vsel %vm328, 0.001, 0.0
  %v332 = vsel %vm329, 0.001, 0.0
  %vm333 = vcmask 195584
  %v335 = vsel %vm333, %v26, 0
  %v338 = vsel %vm333, %v27, 0
  %v341 = vsel %vm333, %v28, 0
  %343 = vmatprep.subr.mxu0 0.0
  %344 = vmatpush1.msra.mxu0 0.0
  %345 = vmatprep.subr.mxu0 0.0
  %346 = vmatpush1.msra.mxu0 0.0
  %347 = vmatprep.subr.mxu0 0.0
  %348 = vmatpush1.msra.mxu0 0.0
  %349 = vmatprep.subr.mxu0 0.0
  %350 = vmatpush1.msra.mxu0 0.0
  %351 = vmatprep.subr.mxu0 0.0
  %352 = vmatpush1.msra.mxu0 0.0
  %353 = vmatprep.subr.mxu0 0.0
  %354 = vmatpush1.msra.mxu0 0.0
  %355 = vmatprep.subr.mxu0 0.0
  %356 = vmatpush1.msra.mxu0 0.0
  %357 = vmatprep.subr.mxu0 0.0
  %358 = vmatpush1.msra.mxu0 0.0
  %359 = vmatprep.subr.mxu0 0.0
  %360 = vmatpush1.msra.mxu0 0.0
  %361 = vmatprep.subr.mxu0 0.0
  %362 = vmatpush1.msra.mxu0 0.0
  %363 = vmatprep.subr.mxu0 0.0
  %364 = vmatpush1.msra.mxu0 0.0
  %365 = vmatprep.subr.mxu0 0.0
  %366 = vmatpush1.msra.mxu0 0.0
  %367 = vmatprep.subr.mxu0 0.0
  %368 = vmatpush1.msra.mxu0 0.0
  %369 = vmatprep.subr.mxu0 0.0
  %370 = vmatpush1.msra.mxu0 %v31
  %371 = vmatprep.subr.mxu0 0.0
  %372 = vmatpush1.msra.mxu0 %v30
  %373 = vmatprep.subr.mxu0 0.0
  %374 = vmatpush1.msra.mxu0 %v29
  %375 = vmatprep.subr.mxu0 0.0
  %376 = vmatpush2.msra.mxu0 0.0
  %377 = vmatprep.subr.mxu0 0.0
  %378 = vmatpush2.msra.mxu0 0.0
  %379 = vmatprep.subr.mxu0 0.0
  %380 = vmatpush2.msra.mxu0 0.0
  %381 = vmatprep.subr.mxu0 0.0
  %382 = vmatpush2.msra.mxu0 0.0
  %383 = vmatprep.subr.mxu0 0.0
  %384 = vmatpush2.msra.mxu0 0.0
  %385 = vmatprep.subr.mxu0 0.0
  %386 = vmatpush2.msra.mxu0 0.0
  %387 = vmatprep.subr.mxu0 0.0
  %388 = vmatpush2.msra.mxu0 0.0
  %389 = vmatprep.subr.mxu0 0.0
  %390 = vmatpush2.msra.mxu0 0.0
  %391 = vmatprep.subr.mxu0 0.0
  %392 = vmatpush2.msra.mxu0 0.0
  %393 = vmatprep.subr.mxu0 0.0
  %394 = vmatpush2.msra.mxu0 0.0
  %395 = vmatprep.subr.mxu0 0.0
  %396 = vmatpush2.msra.mxu0 0.0
  %397 = vmatprep.subr.mxu0 0.0
  %398 = vmatpush2.msra.mxu0 0.0
  %399 = vmatprep.subr.mxu0 0.0
  %400 = vmatpush2.msra.mxu0 0.0
  %401 = vmatprep.subr.mxu0 0.0
  %402 = vmatpush2.msra.mxu0 0.0
  %403 = vmatprep.subr.mxu0 0.0
  %404 = vmatpush2.msra.mxu0 0.0
  %405 = vmatprep.subr.mxu0 0.0
  %406 = vmatpush2.msra.mxu0 0.0
  %407 = vmatprep.mubr.f32.mxu0 0.0
  %408 = vmatmul.mubr.f32.gmra.mxu0 %v335
  %v409 = vpop.f32.mrf.mxu0
  %v410 = vadd.f32 %v330, %v409
  %v411 = vpop.f32.mrf.mxu0
  %412 = vmatprep.mubr.f32.mxu0 0.0
  %413 = vmatmul.mubr.f32.gmra.mxu0 %v338
  %v414 = vpop.f32.mrf.mxu0
  %v415 = vadd.f32 %v331, %v414
  %v416 = vpop.f32.mrf.mxu0
  %417 = vmatprep.mubr.f32.mxu0 0.0
  %418 = vmatmul.mubr.f32.gmra.mxu0 %v341
  %v419 = vpop.f32.mrf.mxu0
  %v420 = vadd.f32 %v332, %v419
  %v421 = vpop.f32.mrf.mxu0
  %422 = vdwg.mxu0
  %v423 = vadd.f32 %v410, %v210
  %v424 = vadd.f32 %v415, %v215
  %v425 = vadd.f32 %v420, %v220
  %v426 = vadd.f32 %v423, %v308
  %v427 = vadd.f32 %v424, %v313
  %v428 = vadd.f32 %v425, %v318
  %429 = vst.msk [vmem:[%s7] sm:$0xff] %vm333, %v426
  %430 = vst.msk [vmem:[%s7 + $0x8] sm:$0xff] %vm333, %v427
  %431 = vst.msk [vmem:[%s7 + $0x10] sm:$0xff] %vm333, %v428
  // Predicated region
  $region30: #{_precompute.1} parent=0 // pred_check
    _
  $region31: #{_precompute.1} parent=0 // pred_check_branch
    %433 = sbr.rel (0) target = $region33
  $region32: #{_precompute.1} parent=0 // pred_region
    _
  $region33: #{_precompute.1} parent=0 // pred_fallthru
    _
  // Predicated region
  $region34: #{_precompute.1} parent=0 // pred_check
    _
  $region35: #{_precompute.1} parent=0 // pred_check_branch
    %435 = sbr.rel (0) target = $region37
  $region36: #{_precompute.1} parent=0 // pred_region
    _
  $region37: #{_precompute.1} parent=0 // pred_fallthru
    _

</llo_original>
